<compile_context>
chip_gen: v7x
topology: tpu7x:2x2x1
jax: 0.10.0
libtpu: 0.0.40
codegen_flags: <defaults>
</compile_context>

<pallas_src>
import math

import jax
import jax.numpy as jnp
from jax.experimental import pallas as pl
from jax.experimental.pallas import tpu as pltpu

BN_EPS = 1e-5

HID1 = 256      # fc1..fc4 width
HID2 = 128      # fc5 width
OUT_PAD = 128   # fc6 output padded to one full lane tile (real width = 25)
SLAB_W = 256    # width of the packed row-vector slab

# slab row layout  (all rows are [1, 256]; narrow params live in leading cols)
ROW_W1 = 0                      # fc1 weight row (input_dim == 1)
ROW_B1, ROW_G1, ROW_BE1 = 1, 2, 3
ROW_B2, ROW_G2, ROW_BE2 = 4, 5, 6
ROW_B3, ROW_G3, ROW_BE3 = 7, 8, 9
ROW_B4, ROW_G4, ROW_BE4 = 10, 11, 12
ROW_B5, ROW_G5, ROW_BE5 = 13, 14, 15    # first 128 cols used
ROW_B6 = 16                              # first OUT_PAD cols used
ROW_SCALE = 17                           # 0.5*(upper-lower)
ROW_LOW = 18                             # 0.5*(upper-lower)+lower
SLAB_ROWS = 19


def finger_mlp_kernel(x_ref, slab_ref, w2_ref, w3_ref, w4_ref, w5_ref, w6_ref,
                      o_ref):
    def row(i, w=SLAB_W):
        return slab_ref[i:i + 1, :w]

    def bn_tanh(h, g, be):
        # training-mode BatchNorm1d: batch mean, biased batch variance.
        m = jnp.mean(h, axis=0, keepdims=True)
        c = h - m
        v = jnp.mean(c * c, axis=0, keepdims=True)
        return jnp.tanh(c * jax.lax.rsqrt(v + BN_EPS) * g + be)

    def mm(h, w_ref, b):
        # f32 MXU matmul, f32 accumulation.
        return jnp.dot(h, w_ref[...], preferred_element_type=jnp.float32) + b

    x = x_ref[...]                                           # [B, 1] f32

    # fc1 (input_dim == 1): pure VPU outer product.
    h = bn_tanh(x * row(ROW_W1) + row(ROW_B1), row(ROW_G1), row(ROW_BE1))
    residual = h
    h = bn_tanh(mm(h, w2_ref, row(ROW_B2)), row(ROW_G2), row(ROW_BE2))   # fc2
    h = bn_tanh(mm(h, w3_ref, row(ROW_B3)), row(ROW_G3), row(ROW_BE3))   # fc3
    h = h + residual
    h = bn_tanh(mm(h, w4_ref, row(ROW_B4)), row(ROW_G4), row(ROW_BE4))   # fc4
    h = bn_tanh(mm(h, w5_ref, row(ROW_B5, HID2)),                        # fc5
                row(ROW_G5, HID2), row(ROW_BE5, HID2))
    h = jnp.tanh(mm(h, w6_ref, row(ROW_B6, OUT_PAD)))                    # fc6
    # folded output affine:  0.5*(h+1)*(u-l)+l  ==  h*scale' + low'
    o_ref[...] = h * row(ROW_SCALE, OUT_PAD) + row(ROW_LOW, OUT_PAD)


def finger_mlp_forward(x, slab, w2, w3, w4, w5, w6):
    """x: [B, 1] f32. Returns [B, OUT_PAD] f32 (real joints in cols :25)."""
    B = x.shape[0]
    vmem = pl.BlockSpec(memory_space=pltpu.MemorySpace.VMEM)
    return pl.pallas_call(
        finger_mlp_kernel,
        out_shape=jax.ShapeDtypeStruct((B, OUT_PAD), jnp.float32),
        in_specs=[vmem] * 7,
        out_specs=vmem,
        compiler_params=pltpu.CompilerParams(
            vmem_limit_bytes=16 * 1024 * 1024),
    )(x, slab, w2, w3, w4, w5, w6)


# ----------------------------------------------------------------------------
# Parameter construction (deterministic, mirrors the PyTorch __init__)
# ----------------------------------------------------------------------------
def build_params(key, input_dim, output_dim):
    dims = [(input_dim, HID1), (HID1, HID1), (HID1, HID1), (HID1, HID1),
            (HID1, HID2), (HID2, output_dim)]
    keys = jax.random.split(key, 2 * len(dims))
    P = {}
    for i, (fi, fo) in enumerate(dims):
        bw = math.sqrt(6.0 / (fi + fo))                 # xavier_uniform_
        P[f"w{i+1}"] = jax.random.uniform(keys[2 * i], (fi, fo), jnp.float32,
                                          -bw, bw)      # stored as [in, out]
        bb = 1.0 / math.sqrt(fi)                        # default Linear bias init
        P[f"b{i+1}"] = jax.random.uniform(keys[2 * i + 1], (1, fo), jnp.float32,
                                          -bb, bb)
        if i < 5:                                        # bn1..bn5 init
            P[f"g{i+1}"] = jnp.ones((1, fo), jnp.float32)
            P[f"be{i+1}"] = jnp.zeros((1, fo), jnp.float32)
    return P


def pack_kernel_inputs(P, lim_scale, lim_low, output_dim):
    """Pack all row-vector params into one slab; pad fc6 weight to 128 lanes."""
    slab = jnp.zeros((SLAB_ROWS, SLAB_W), jnp.float32)

    def put(r, v):
        return slab.at[r, :v.shape[0]].set(v)

    slab = put(ROW_W1, P["w1"][0])                       # fc1 weight row (K=1)
    rows = [(ROW_B1, "b1"), (ROW_G1, "g1"), (ROW_BE1, "be1"),
            (ROW_B2, "b2"), (ROW_G2, "g2"), (ROW_BE2, "be2"),
            (ROW_B3, "b3"), (ROW_G3, "g3"), (ROW_BE3, "be3"),
            (ROW_B4, "b4"), (ROW_G4, "g4"), (ROW_BE4, "be4"),
            (ROW_B5, "b5"), (ROW_G5, "g5"), (ROW_BE5, "be5"),
            (ROW_B6, "b6")]
    for r, name in rows:
        slab = put(r, P[name][0])

    scale_f = 0.5 * lim_scale[0]                         # folded output affine
    low_f = 0.5 * lim_scale[0] + lim_low[0]
    slab = put(ROW_SCALE, scale_f)
    slab = put(ROW_LOW, low_f)

    w6 = (jnp.zeros((HID2, OUT_PAD), jnp.float32)
          .at[:, :output_dim].set(P["w6"]))
    return slab, P["w2"], P["w3"], P["w4"], P["w5"], w6


# ----------------------------------------------------------------------------
# References
# ----------------------------------------------------------------------------
def reference_matched(x, slab, w2, w3, w4, w5, w6):
    """Pure-JAX reference with identical math to the kernel."""
    def bn_tanh(h, g, be):
        m = jnp.mean(h, axis=0, keepdims=True)
        c = h - m
        v = jnp.mean(c * c, axis=0, keepdims=True)
        return jnp.tanh(c * jax.lax.rsqrt(v + BN_EPS) * g + be)

    def mm(h, w, b):
        return jnp.dot(h, w, preferred_element_type=jnp.float32,
                       precision=jax.lax.Precision.HIGHEST) + b

    r_ = lambda i, w=SLAB_W: slab[i:i + 1, :w]
    h = bn_tanh(x * r_(ROW_W1) + r_(ROW_B1), r_(ROW_G1), r_(ROW_BE1))
    res = h
    h = bn_tanh(mm(h, w2, r_(ROW_B2)), r_(ROW_G2), r_(ROW_BE2))
    h = bn_tanh(mm(h, w3, r_(ROW_B3)), r_(ROW_G3), r_(ROW_BE3))
    h = h + res
    h = bn_tanh(mm(h, w4, r_(ROW_B4)), r_(ROW_G4), r_(ROW_BE4))
    h = bn_tanh(mm(h, w5, r_(ROW_B5, HID2)), r_(ROW_G5, HID2), r_(ROW_BE5, HID2))
    h = jnp.tanh(mm(h, w6, r_(ROW_B6, OUT_PAD)))
    return h * r_(ROW_SCALE, OUT_PAD) + r_(ROW_LOW, OUT_PAD)


def reference_torch(x, P, lim_scale, lim_low):
    """Full-f32 reference reproducing the PyTorch forward (semantic check)."""
    def bn_tanh(h, g, be):
        m = jnp.mean(h, axis=0, keepdims=True)
        v = jnp.mean((h - m) ** 2, axis=0, keepdims=True)
        return jnp.tanh((h - m) / jnp.sqrt(v + BN_EPS) * g + be)

    def mm(h, w):
        return jnp.dot(h, w, preferred_element_type=jnp.float32,
                       precision=jax.lax.Precision.HIGHEST)

    h = bn_tanh(mm(x, P["w1"]) + P["b1"], P["g1"], P["be1"])
    r = h
    h = bn_tanh(mm(h, P["w2"]) + P["b2"], P["g2"], P["be2"])
    h = bn_tanh(mm(h, P["w3"]) + P["b3"], P["g3"], P["be3"])
    h = h + r
    h = bn_tanh(mm(h, P["w4"]) + P["b4"], P["g4"], P["be4"])
    h = bn_tanh(mm(h, P["w5"]) + P["b5"], P["g5"], P["be5"])
    h = jnp.tanh(mm(h, P["w6"]) + P["b6"])
    h = 0.5 * (h + 1.0)
    return h * lim_scale + lim_low


if __name__ == "__main__":
    INPUT_DIM = 1      # M = 1 in the training script
    OUTPUT_DIM = 25    # TODO(synk): joint_dim comes from a URDF chain in the
                       # original script; hardcoded to 25 (matches the limits).
    BATCH = 64         # full batch per call: BN statistics are over the batch

    key = jax.random.PRNGKey(0)
    k_x, k_p = jax.random.split(key)

    x = jax.random.normal(k_x, (BATCH, INPUT_DIM), jnp.float32)   # [64, 1]
    P = build_params(k_p, INPUT_DIM, OUTPUT_DIM)

    upper = jnp.array([0.05] * 9 + [0.3] * 7 + [0.05] * 9, jnp.float32)
    lower = jnp.zeros((OUTPUT_DIM,), jnp.float32)
    lim_scale = (upper - lower)[None, :]
    lim_low = lower[None, :]

    slab, w2, w3, w4, w5, w6 = pack_kernel_inputs(P, lim_scale, lim_low,
                                                  OUTPUT_DIM)

    out_pad = finger_mlp_forward(x, slab, w2, w3, w4, w5, w6)
    out = out_pad[:, :OUTPUT_DIM]                      # [BATCH, 25]
    jax.block_until_ready(out)

    ref_match = reference_matched(x, slab, w2, w3, w4, w5, w6)[:, :OUTPUT_DIM]
    ref_f32 = reference_torch(x, P, lim_scale, lim_low)

    assert out.shape == (BATCH, OUTPUT_DIM)
    assert bool(jnp.all(jnp.isfinite(out)))
    # tight check vs a reference with identical math
    err_m = float(jnp.max(jnp.abs(out - ref_match)))
    assert err_m < 2e-3, f"mismatch vs matched ref: {err_m}"
    # semantic check vs the full-f32 PyTorch-equivalent forward
    err_t = float(jnp.max(jnp.abs(out - ref_f32)))
    assert err_t < 5e-3, f"mismatch vs f32 ref: {err_t}"

    print("KERNEL_OK")
</pallas_src>

<mosaic_0001>
module attributes {stable_mosaic.version = 11 : i64} {
  func.func @finger_mlp_kernel(%arg0: memref<64x1xf32, #tpu.memory_space<vmem>>, %arg1: memref<19x256xf32, #tpu.memory_space<vmem>>, %arg2: memref<256x256xf32, #tpu.memory_space<vmem>>, %arg3: memref<256x256xf32, #tpu.memory_space<vmem>>, %arg4: memref<256x256xf32, #tpu.memory_space<vmem>>, %arg5: memref<256x128xf32, #tpu.memory_space<vmem>>, %arg6: memref<128x128xf32, #tpu.memory_space<vmem>>, %arg7: memref<64x128xf32, #tpu.memory_space<vmem>>) attributes {dimension_semantics = [], scalar_prefetch = 0 : i64, scratch_operands = 0 : i64, tpu.core_type = #tpu.core_type<tc>} {
    %c0 = arith.constant 0 : index
    %c0_0 = arith.constant 0 : index
    %0 = vector.load %arg0[%c0, %c0_0] : memref<64x1xf32, #tpu.memory_space<vmem>>, vector<64x1xf32>
    %c0_1 = arith.constant 0 : index
    %c0_2 = arith.constant 0 : index
    %1 = vector.load %arg1[%c0_1, %c0_2] : memref<19x256xf32, #tpu.memory_space<vmem>>, vector<1x256xf32>
    %2 = vector.broadcast %0 : vector<64x1xf32> to vector<64x256xf32>
    %3 = vector.broadcast %1 : vector<1x256xf32> to vector<64x256xf32>
    %4 = arith.mulf %2, %3 : vector<64x256xf32>
    %c1 = arith.constant 1 : index
    %c0_3 = arith.constant 0 : index
    %5 = vector.load %arg1[%c1, %c0_3] : memref<19x256xf32, #tpu.memory_space<vmem>>, vector<1x256xf32>
    %6 = vector.broadcast %5 : vector<1x256xf32> to vector<64x256xf32>
    %7 = arith.addf %4, %6 : vector<64x256xf32>
    %c2 = arith.constant 2 : index
    %c0_4 = arith.constant 0 : index
    %8 = vector.load %arg1[%c2, %c0_4] : memref<19x256xf32, #tpu.memory_space<vmem>>, vector<1x256xf32>
    %c3 = arith.constant 3 : index
    %c0_5 = arith.constant 0 : index
    %9 = vector.load %arg1[%c3, %c0_5] : memref<19x256xf32, #tpu.memory_space<vmem>>, vector<1x256xf32>
    %cst = arith.constant dense<0.000000e+00> : vector<256xf32>
    %10 = vector.multi_reduction <add>, %7, %cst [0] : vector<64x256xf32> to vector<256xf32>
    %11 = vector.shape_cast %10 : vector<256xf32> to vector<1x256xf32>
    %cst_6 = arith.constant 6.400000e+01 : f32
    %12 = vector.broadcast %cst_6 : f32 to vector<1x256xf32>
    %13 = arith.divf %11, %12 : vector<1x256xf32>
    %14 = vector.broadcast %13 : vector<1x256xf32> to vector<64x256xf32>
    %15 = arith.subf %7, %14 : vector<64x256xf32>
    %16 = arith.mulf %15, %15 : vector<64x256xf32>
    %cst_7 = arith.constant dense<0.000000e+00> : vector<256xf32>
    %17 = vector.multi_reduction <add>, %16, %cst_7 [0] : vector<64x256xf32> to vector<256xf32>
    %18 = vector.shape_cast %17 : vector<256xf32> to vector<1x256xf32>
    %cst_8 = arith.constant 6.400000e+01 : f32
    %19 = vector.broadcast %cst_8 : f32 to vector<1x256xf32>
    %20 = arith.divf %18, %19 : vector<1x256xf32>
    %cst_9 = arith.constant 9.99999974E-6 : f32
    %21 = vector.broadcast %cst_9 : f32 to vector<1x256xf32>
    %22 = arith.addf %20, %21 : vector<1x256xf32>
    %23 = math.rsqrt %22 : vector<1x256xf32>
    %24 = vector.broadcast %23 : vector<1x256xf32> to vector<64x256xf32>
    %25 = arith.mulf %15, %24 : vector<64x256xf32>
    %26 = vector.broadcast %8 : vector<1x256xf32> to vector<64x256xf32>
    %27 = arith.mulf %25, %26 : vector<64x256xf32>
    %28 = vector.broadcast %9 : vector<1x256xf32> to vector<64x256xf32>
    %29 = arith.addf %27, %28 : vector<64x256xf32>
    %30 = math.tanh %29 : vector<64x256xf32>
    %c4 = arith.constant 4 : index
    %c0_10 = arith.constant 0 : index
    %31 = vector.load %arg1[%c4, %c0_10] : memref<19x256xf32, #tpu.memory_space<vmem>>, vector<1x256xf32>
    %c0_11 = arith.constant 0 : index
    %c0_12 = arith.constant 0 : index
    %32 = vector.load %arg2[%c0_11, %c0_12] : memref<256x256xf32, #tpu.memory_space<vmem>>, vector<256x256xf32>
    %cst_13 = arith.constant dense<0.000000e+00> : vector<64x256xf32>
    %33 = tpu.matmul %30, %32, %cst_13 {dimension_numbers = #tpu.dot_dimension_numbers<[1], [0], [0], [1], [0, 0, 1, 1], [], []>} : vector<64x256xf32>, vector<256x256xf32>, vector<64x256xf32> -> vector<64x256xf32>
    %34 = vector.broadcast %31 : vector<1x256xf32> to vector<64x256xf32>
    %35 = arith.addf %33, %34 : vector<64x256xf32>
    %c5 = arith.constant 5 : index
    %c0_14 = arith.constant 0 : index
    %36 = vector.load %arg1[%c5, %c0_14] : memref<19x256xf32, #tpu.memory_space<vmem>>, vector<1x256xf32>
    %c6 = arith.constant 6 : index
    %c0_15 = arith.constant 0 : index
    %37 = vector.load %arg1[%c6, %c0_15] : memref<19x256xf32, #tpu.memory_space<vmem>>, vector<1x256xf32>
    %cst_16 = arith.constant dense<0.000000e+00> : vector<256xf32>
    %38 = vector.multi_reduction <add>, %35, %cst_16 [0] : vector<64x256xf32> to vector<256xf32>
    %39 = vector.shape_cast %38 : vector<256xf32> to vector<1x256xf32>
    %cst_17 = arith.constant 6.400000e+01 : f32
    %40 = vector.broadcast %cst_17 : f32 to vector<1x256xf32>
    %41 = arith.divf %39, %40 : vector<1x256xf32>
    %42 = vector.broadcast %41 : vector<1x256xf32> to vector<64x256xf32>
    %43 = arith.subf %35, %42 : vector<64x256xf32>
    %44 = arith.mulf %43, %43 : vector<64x256xf32>
    %cst_18 = arith.constant dense<0.000000e+00> : vector<256xf32>
    %45 = vector.multi_reduction <add>, %44, %cst_18 [0] : vector<64x256xf32> to vector<256xf32>
    %46 = vector.shape_cast %45 : vector<256xf32> to vector<1x256xf32>
    %cst_19 = arith.constant 6.400000e+01 : f32
    %47 = vector.broadcast %cst_19 : f32 to vector<1x256xf32>
    %48 = arith.divf %46, %47 : vector<1x256xf32>
    %cst_20 = arith.constant 9.99999974E-6 : f32
    %49 = vector.broadcast %cst_20 : f32 to vector<1x256xf32>
    %50 = arith.addf %48, %49 : vector<1x256xf32>
    %51 = math.rsqrt %50 : vector<1x256xf32>
    %52 = vector.broadcast %51 : vector<1x256xf32> to vector<64x256xf32>
    %53 = arith.mulf %43, %52 : vector<64x256xf32>
    %54 = vector.broadcast %36 : vector<1x256xf32> to vector<64x256xf32>
    %55 = arith.mulf %53, %54 : vector<64x256xf32>
    %56 = vector.broadcast %37 : vector<1x256xf32> to vector<64x256xf32>
    %57 = arith.addf %55, %56 : vector<64x256xf32>
    %58 = math.tanh %57 : vector<64x256xf32>
    %c7 = arith.constant 7 : index
    %c0_21 = arith.constant 0 : index
    %59 = vector.load %arg1[%c7, %c0_21] : memref<19x256xf32, #tpu.memory_space<vmem>>, vector<1x256xf32>
    %c0_22 = arith.constant 0 : index
    %c0_23 = arith.constant 0 : index
    %60 = vector.load %arg3[%c0_22, %c0_23] : memref<256x256xf32, #tpu.memory_space<vmem>>, vector<256x256xf32>
    %cst_24 = arith.constant dense<0.000000e+00> : vector<64x256xf32>
    %61 = tpu.matmul %58, %60, %cst_24 {dimension_numbers = #tpu.dot_dimension_numbers<[1], [0], [0], [1], [0, 0, 1, 1], [], []>} : vector<64x256xf32>, vector<256x256xf32>, vector<64x256xf32> -> vector<64x256xf32>
    %62 = vector.broadcast %59 : vector<1x256xf32> to vector<64x256xf32>
    %63 = arith.addf %61, %62 : vector<64x256xf32>
    %c8 = arith.constant 8 : index
    %c0_25 = arith.constant 0 : index
    %64 = vector.load %arg1[%c8, %c0_25] : memref<19x256xf32, #tpu.memory_space<vmem>>, vector<1x256xf32>
    %c9 = arith.constant 9 : index
    %c0_26 = arith.constant 0 : index
    %65 = vector.load %arg1[%c9, %c0_26] : memref<19x256xf32, #tpu.memory_space<vmem>>, vector<1x256xf32>
    %cst_27 = arith.constant dense<0.000000e+00> : vector<256xf32>
    %66 = vector.multi_reduction <add>, %63, %cst_27 [0] : vector<64x256xf32> to vector<256xf32>
    %67 = vector.shape_cast %66 : vector<256xf32> to vector<1x256xf32>
    %cst_28 = arith.constant 6.400000e+01 : f32
    %68 = vector.broadcast %cst_28 : f32 to vector<1x256xf32>
    %69 = arith.divf %67, %68 : vector<1x256xf32>
    %70 = vector.broadcast %69 : vector<1x256xf32> to vector<64x256xf32>
    %71 = arith.subf %63, %70 : vector<64x256xf32>
    %72 = arith.mulf %71, %71 : vector<64x256xf32>
    %cst_29 = arith.constant dense<0.000000e+00> : vector<256xf32>
    %73 = vector.multi_reduction <add>, %72, %cst_29 [0] : vector<64x256xf32> to vector<256xf32>
    %74 = vector.shape_cast %73 : vector<256xf32> to vector<1x256xf32>
    %cst_30 = arith.constant 6.400000e+01 : f32
    %75 = vector.broadcast %cst_30 : f32 to vector<1x256xf32>
    %76 = arith.divf %74, %75 : vector<1x256xf32>
    %cst_31 = arith.constant 9.99999974E-6 : f32
    %77 = vector.broadcast %cst_31 : f32 to vector<1x256xf32>
    %78 = arith.addf %76, %77 : vector<1x256xf32>
    %79 = math.rsqrt %78 : vector<1x256xf32>
    %80 = vector.broadcast %79 : vector<1x256xf32> to vector<64x256xf32>
    %81 = arith.mulf %71, %80 : vector<64x256xf32>
    %82 = vector.broadcast %64 : vector<1x256xf32> to vector<64x256xf32>
    %83 = arith.mulf %81, %82 : vector<64x256xf32>
    %84 = vector.broadcast %65 : vector<1x256xf32> to vector<64x256xf32>
    %85 = arith.addf %83, %84 : vector<64x256xf32>
    %86 = math.tanh %85 : vector<64x256xf32>
    %87 = arith.addf %86, %30 : vector<64x256xf32>
    %c10 = arith.constant 10 : index
    %c0_32 = arith.constant 0 : index
    %88 = vector.load %arg1[%c10, %c0_32] : memref<19x256xf32, #tpu.memory_space<vmem>>, vector<1x256xf32>
    %c0_33 = arith.constant 0 : index
    %c0_34 = arith.constant 0 : index
    %89 = vector.load %arg4[%c0_33, %c0_34] : memref<256x256xf32, #tpu.memory_space<vmem>>, vector<256x256xf32>
    %cst_35 = arith.constant dense<0.000000e+00> : vector<64x256xf32>
    %90 = tpu.matmul %87, %89, %cst_35 {dimension_numbers = #tpu.dot_dimension_numbers<[1], [0], [0], [1], [0, 0, 1, 1], [], []>} : vector<64x256xf32>, vector<256x256xf32>, vector<64x256xf32> -> vector<64x256xf32>
    %91 = vector.broadcast %88 : vector<1x256xf32> to vector<64x256xf32>
    %92 = arith.addf %90, %91 : vector<64x256xf32>
    %c11 = arith.constant 11 : index
    %c0_36 = arith.constant 0 : index
    %93 = vector.load %arg1[%c11, %c0_36] : memref<19x256xf32, #tpu.memory_space<vmem>>, vector<1x256xf32>
    %c12 = arith.constant 12 : index
    %c0_37 = arith.constant 0 : index
    %94 = vector.load %arg1[%c12, %c0_37] : memref<19x256xf32, #tpu.memory_space<vmem>>, vector<1x256xf32>
    %cst_38 = arith.constant dense<0.000000e+00> : vector<256xf32>
    %95 = vector.multi_reduction <add>, %92, %cst_38 [0] : vector<64x256xf32> to vector<256xf32>
    %96 = vector.shape_cast %95 : vector<256xf32> to vector<1x256xf32>
    %cst_39 = arith.constant 6.400000e+01 : f32
    %97 = vector.broadcast %cst_39 : f32 to vector<1x256xf32>
    %98 = arith.divf %96, %97 : vector<1x256xf32>
    %99 = vector.broadcast %98 : vector<1x256xf32> to vector<64x256xf32>
    %100 = arith.subf %92, %99 : vector<64x256xf32>
    %101 = arith.mulf %100, %100 : vector<64x256xf32>
    %cst_40 = arith.constant dense<0.000000e+00> : vector<256xf32>
    %102 = vector.multi_reduction <add>, %101, %cst_40 [0] : vector<64x256xf32> to vector<256xf32>
    %103 = vector.shape_cast %102 : vector<256xf32> to vector<1x256xf32>
    %cst_41 = arith.constant 6.400000e+01 : f32
    %104 = vector.broadcast %cst_41 : f32 to vector<1x256xf32>
    %105 = arith.divf %103, %104 : vector<1x256xf32>
    %cst_42 = arith.constant 9.99999974E-6 : f32
    %106 = vector.broadcast %cst_42 : f32 to vector<1x256xf32>
    %107 = arith.addf %105, %106 : vector<1x256xf32>
    %108 = math.rsqrt %107 : vector<1x256xf32>
    %109 = vector.broadcast %108 : vector<1x256xf32> to vector<64x256xf32>
    %110 = arith.mulf %100, %109 : vector<64x256xf32>
    %111 = vector.broadcast %93 : vector<1x256xf32> to vector<64x256xf32>
    %112 = arith.mulf %110, %111 : vector<64x256xf32>
    %113 = vector.broadcast %94 : vector<1x256xf32> to vector<64x256xf32>
    %114 = arith.addf %112, %113 : vector<64x256xf32>
    %115 = math.tanh %114 : vector<64x256xf32>
    %c13 = arith.constant 13 : index
    %c0_43 = arith.constant 0 : index
    %116 = vector.load %arg1[%c13, %c0_43] : memref<19x256xf32, #tpu.memory_space<vmem>>, vector<1x128xf32>
    %c0_44 = arith.constant 0 : index
    %c0_45 = arith.constant 0 : index
    %117 = vector.load %arg5[%c0_44, %c0_45] : memref<256x128xf32, #tpu.memory_space<vmem>>, vector<256x128xf32>
    %cst_46 = arith.constant dense<0.000000e+00> : vector<64x128xf32>
    %118 = tpu.matmul %115, %117, %cst_46 {dimension_numbers = #tpu.dot_dimension_numbers<[1], [0], [0], [1], [0, 0, 1, 1], [], []>} : vector<64x256xf32>, vector<256x128xf32>, vector<64x128xf32> -> vector<64x128xf32>
    %119 = vector.broadcast %116 : vector<1x128xf32> to vector<64x128xf32>
    %120 = arith.addf %118, %119 : vector<64x128xf32>
    %c14 = arith.constant 14 : index
    %c0_47 = arith.constant 0 : index
    %121 = vector.load %arg1[%c14, %c0_47] : memref<19x256xf32, #tpu.memory_space<vmem>>, vector<1x128xf32>
    %c15 = arith.constant 15 : index
    %c0_48 = arith.constant 0 : index
    %122 = vector.load %arg1[%c15, %c0_48] : memref<19x256xf32, #tpu.memory_space<vmem>>, vector<1x128xf32>
    %cst_49 = arith.constant dense<0.000000e+00> : vector<128xf32>
    %123 = vector.multi_reduction <add>, %120, %cst_49 [0] : vector<64x128xf32> to vector<128xf32>
    %124 = vector.shape_cast %123 : vector<128xf32> to vector<1x128xf32>
    %cst_50 = arith.constant 6.400000e+01 : f32
    %125 = vector.broadcast %cst_50 : f32 to vector<1x128xf32>
    %126 = arith.divf %124, %125 : vector<1x128xf32>
    %127 = vector.broadcast %126 : vector<1x128xf32> to vector<64x128xf32>
    %128 = arith.subf %120, %127 : vector<64x128xf32>
    %129 = arith.mulf %128, %128 : vector<64x128xf32>
    %cst_51 = arith.constant dense<0.000000e+00> : vector<128xf32>
    %130 = vector.multi_reduction <add>, %129, %cst_51 [0] : vector<64x128xf32> to vector<128xf32>
    %131 = vector.shape_cast %130 : vector<128xf32> to vector<1x128xf32>
    %cst_52 = arith.constant 6.400000e+01 : f32
    %132 = vector.broadcast %cst_52 : f32 to vector<1x128xf32>
    %133 = arith.divf %131, %132 : vector<1x128xf32>
    %cst_53 = arith.constant 9.99999974E-6 : f32
    %134 = vector.broadcast %cst_53 : f32 to vector<1x128xf32>
    %135 = arith.addf %133, %134 : vector<1x128xf32>
    %136 = math.rsqrt %135 : vector<1x128xf32>
    %137 = vector.broadcast %136 : vector<1x128xf32> to vector<64x128xf32>
    %138 = arith.mulf %128, %137 : vector<64x128xf32>
    %139 = vector.broadcast %121 : vector<1x128xf32> to vector<64x128xf32>
    %140 = arith.mulf %138, %139 : vector<64x128xf32>
    %141 = vector.broadcast %122 : vector<1x128xf32> to vector<64x128xf32>
    %142 = arith.addf %140, %141 : vector<64x128xf32>
    %143 = math.tanh %142 : vector<64x128xf32>
    %c16 = arith.constant 16 : index
    %c0_54 = arith.constant 0 : index
    %144 = vector.load %arg1[%c16, %c0_54] : memref<19x256xf32, #tpu.memory_space<vmem>>, vector<1x128xf32>
    %c0_55 = arith.constant 0 : index
    %c0_56 = arith.constant 0 : index
    %145 = vector.load %arg6[%c0_55, %c0_56] : memref<128x128xf32, #tpu.memory_space<vmem>>, vector<128x128xf32>
    %cst_57 = arith.constant dense<0.000000e+00> : vector<64x128xf32>
    %146 = tpu.matmul %143, %145, %cst_57 {dimension_numbers = #tpu.dot_dimension_numbers<[1], [0], [0], [1], [0, 0, 1, 1], [], []>} : vector<64x128xf32>, vector<128x128xf32>, vector<64x128xf32> -> vector<64x128xf32>
    %147 = vector.broadcast %144 : vector<1x128xf32> to vector<64x128xf32>
    %148 = arith.addf %146, %147 : vector<64x128xf32>
    %149 = math.tanh %148 : vector<64x128xf32>
    %c17 = arith.constant 17 : index
    %c0_58 = arith.constant 0 : index
    %150 = vector.load %arg1[%c17, %c0_58] : memref<19x256xf32, #tpu.memory_space<vmem>>, vector<1x128xf32>
    %151 = vector.broadcast %150 : vector<1x128xf32> to vector<64x128xf32>
    %152 = arith.mulf %149, %151 : vector<64x128xf32>
    %c18 = arith.constant 18 : index
    %c0_59 = arith.constant 0 : index
    %153 = vector.load %arg1[%c18, %c0_59] : memref<19x256xf32, #tpu.memory_space<vmem>>, vector<1x128xf32>
    %154 = vector.broadcast %153 : vector<1x128xf32> to vector<64x128xf32>
    %155 = arith.addf %152, %154 : vector<64x128xf32>
    %c0_60 = arith.constant 0 : index
    %c0_61 = arith.constant 0 : index
    %156 = vector.load %arg7[%c0_60, %c0_61] : memref<64x128xf32, #tpu.memory_space<vmem>>, vector<64x128xf32>
    tpu.vector_store %arg7[%c0_60, %c0_61], %155 {strides = array<i32>} : memref<64x128xf32, #tpu.memory_space<vmem>>, vector<64x128xf32>,
    return
  }
}

</mosaic_0001>

<llo_original>
// kernel: tpu_custom_call.1
$region0: #{tpu_custom_call.1}
  #allocation0 [shape = 'u32[]', space=smem, size = 0x4, offset = 0x4, fixed_abs, tag = 'smem constant byte address 0x4 - core index']
  #allocation1 [shape = 'u32[144,128]{1,0:T(1,128)}', space=vmem, size = 0x12000, scoped, tag = 'internal scratch']
  %s0 = inlined_call_operand.vmem [shape: f32[64,1], index: 0, kind: input, shape index: {}]
  %s1 = inlined_call_operand.vmem [shape: f32[19,256], index: 1, kind: input, shape index: {}]
  %s2 = inlined_call_operand.hbm [shape: f32[256,256], index: 2, kind: input, shape index: {}]
  %s3 = inlined_call_operand.hbm [shape: f32[256,256], index: 3, kind: input, shape index: {}]
  %s4 = inlined_call_operand.hbm [shape: f32[256,256], index: 4, kind: input, shape index: {}]
  %s5 = inlined_call_operand.hbm [shape: f32[256,128], index: 5, kind: input, shape index: {}]
  %s6 = inlined_call_operand.hbm [shape: f32[128,128], index: 6, kind: input, shape index: {}]
  %s7 = inlined_call_operand.hbm [shape: f32[64,128], index: 7, kind: output, shape index: {}]
  %s8 = sld [smem:[#allocation0]]
  $region58: #{tpu_custom_call.1} parent=0
    _
  %s10 = ssub.s32 1, %s8
  %s11 = scalar_select 0, %s10, %s8
  $region1: #{tpu_custom_call.1} parent=0
    #allocation2 [shape = 'u8[262144]{0}', space=vmem, size = 0x40000, scoped, tag = 'input window, operand 2, single buffered']
    #allocation3 [shape = 's32[1]{0}', space=sflag, size = 0x4, scoped, tag = 'scoped memory for tpu_custom_call.1']
    #allocation4 [shape = 's32[1]{0}', space=sflag, size = 0x4, scoped, tag = 'scoped memory for tpu_custom_call.1']
    #allocation5 [shape = 'u8[262144]{0}', space=vmem, size = 0x40000, scoped, tag = 'input window, operand 3, single buffered']
    #allocation6 [shape = 's32[1]{0}', space=sflag, size = 0x4, scoped, tag = 'scoped memory for tpu_custom_call.1']
    #allocation7 [shape = 'u8[262144]{0}', space=vmem, size = 0x40000, scoped, tag = 'input window, operand 4, single buffered']
    #allocation8 [shape = 'u8[131072]{0}', space=vmem, size = 0x20000, scoped, tag = 'input window, operand 5, single buffered']
    #allocation9 [shape = 's32[1]{0}', space=sflag, size = 0x4, scoped, tag = 'scoped memory for tpu_custom_call.1']
    #allocation10 [shape = 'u8[65536]{0}', space=vmem, size = 0x10000, scoped, tag = 'input window, operand 6, single buffered']
    #allocation11 [shape = 'u8[32768]{0}', space=vmem, size = 0x8000, scoped, tag = 'output window, operand 0, single buffered']
    %12 = vsyncpa [#allocation3], 0
    %13 = vsyncpa [#allocation6], 0
    %14 = vsyncpa [#allocation9], 0
    %15 = vsyncpa [#allocation4], 0
    // Predicated region
    $region2: #{tpu_custom_call.1} parent=1 // pred_check
      _
    $region3: #{tpu_custom_call.1} parent=1 // pred_check_branch
      %17 = sbr.rel (0) target = $region5
    $region4: #{tpu_custom_call.1} parent=1 // pred_region
      _
    $region5: #{tpu_custom_call.1} parent=1 // pred_fallthru
      _
    // Predicated region
    $region6: #{tpu_custom_call.1} parent=1 // pred_check
      _
    $region7: #{tpu_custom_call.1} parent=1 // pred_check_branch
      %19 = sbr.rel (0) target = $region9
    $region8: #{tpu_custom_call.1} parent=1 // pred_region
      _
    $region9: #{tpu_custom_call.1} parent=1 // pred_fallthru
      _
    // Predicated region
    $region10: #{tpu_custom_call.1} parent=1 // pred_check
      _
    $region11: #{tpu_custom_call.1} parent=1 // pred_check_branch
      %21 = sbr.rel (0) target = $region13
    $region12: #{tpu_custom_call.1} parent=1 // pred_region
      %s23 = ssub.s32 8192, 8192
      %24 = vsyncadd [#allocation3], %s23
      %s25 = sshll.u32 [#allocation2], 4
      %s26 = int_to_ptr.vmem [resolvable:$true] %s25
      %31 = dma.hbm_to_vmem [thread:$0]  %s2, 8192, %s26, [#allocation3], 256, 256, 16
    $region13: #{tpu_custom_call.1} parent=1 // pred_fallthru
      _
    // Predicated region
    $region14: #{tpu_custom_call.1} parent=1 // pred_check
      _
    $region15: #{tpu_custom_call.1} parent=1 // pred_check_branch
      %33 = sbr.rel (0) target = $region17
    $region16: #{tpu_custom_call.1} parent=1 // pred_region
      %s35 = ssub.s32 8192, 8192
      %36 = vsyncadd [#allocation6], %s35
      %s37 = sshll.u32 [#allocation5], 4
      %s38 = int_to_ptr.vmem [resolvable:$true] %s37
      %43 = dma.hbm_to_vmem [thread:$0]  %s3, 8192, %s38, [#allocation6], 256, 256, 16
    $region17: #{tpu_custom_call.1} parent=1 // pred_fallthru
      _
    // Predicated region
    $region18: #{tpu_custom_call.1} parent=1 // pred_check
      _
    $region19: #{tpu_custom_call.1} parent=1 // pred_check_branch
      %45 = sbr.rel (0) target = $region21
    $region20: #{tpu_custom_call.1} parent=1 // pred_region
      %s47 = ssub.s32 8192, 8192
      %48 = vsyncadd [#allocation6], %s47
      %s49 = sshll.u32 [#allocation7], 4
      %s50 = int_to_ptr.vmem [resolvable:$true] %s49
      %55 = dma.hbm_to_vmem [thread:$0]  %s4, 8192, %s50, [#allocation6], 256, 256, 16
    $region21: #{tpu_custom_call.1} parent=1 // pred_fallthru
      _
    // Predicated region
    $region22: #{tpu_custom_call.1} parent=1 // pred_check
      _
    $region23: #{tpu_custom_call.1} parent=1 // pred_check_branch
      %57 = sbr.rel (0) target = $region25
    $region24: #{tpu_custom_call.1} parent=1 // pred_region
      %s59 = ssub.s32 4096, 4096
      %60 = vsyncadd [#allocation9], %s59
      %s61 = sshll.u32 [#allocation8], 4
      %s62 = int_to_ptr.vmem [resolvable:$true] %s61
      %67 = dma.hbm_to_vmem [thread:$0]  %s5, 4096, %s62, [#allocation9], 128, 128, 8
    $region25: #{tpu_custom_call.1} parent=1 // pred_fallthru
      _
    // Predicated region
    $region26: #{tpu_custom_call.1} parent=1 // pred_check
      _
    $region27: #{tpu_custom_call.1} parent=1 // pred_check_branch
      %69 = sbr.rel (0) target = $region29
    $region28: #{tpu_custom_call.1} parent=1 // pred_region
      %s71 = ssub.s32 2048, 2048
      %72 = vsyncadd [#allocation9], %s71
      %s73 = sshll.u32 [#allocation10], 4
      %s74 = int_to_ptr.vmem [resolvable:$true] %s73
      %79 = dma.hbm_to_vmem [thread:$0]  %s6, 2048, %s74, [#allocation9], 128, 128, 8
    $region29: #{tpu_custom_call.1} parent=1 // pred_fallthru
      _
    // Predicated region
    $region30: #{tpu_custom_call.1} parent=1 // pred_check
      _
    $region31: #{tpu_custom_call.1} parent=1 // pred_check_branch
      %81 = sbr.rel (0) target = $region33
    $region32: #{tpu_custom_call.1} parent=1 // pred_region
      %82 = dma.done [#allocation3], 8192
    $region33: #{tpu_custom_call.1} parent=1 // pred_fallthru
      _
    // Predicated region
    $region34: #{tpu_custom_call.1} parent=1 // pred_check
      _
    $region35: #{tpu_custom_call.1} parent=1 // pred_check_branch
      %84 = sbr.rel (0) target = $region37
    $region36: #{tpu_custom_call.1} parent=1 // pred_region
      %85 = dma.done [#allocation6], 8192
    $region37: #{tpu_custom_call.1} parent=1 // pred_fallthru
      _
    // Predicated region
    $region38: #{tpu_custom_call.1} parent=1 // pred_check
      _
    $region39: #{tpu_custom_call.1} parent=1 // pred_check_branch
      %87 = sbr.rel (0) target = $region41
    $region40: #{tpu_custom_call.1} parent=1 // pred_region
      %88 = dma.done [#allocation6], 8192
    $region41: #{tpu_custom_call.1} parent=1 // pred_fallthru
      _
    // Predicated region
    $region42: #{tpu_custom_call.1} parent=1 // pred_check
      _
    $region43: #{tpu_custom_call.1} parent=1 // pred_check_branch
      %90 = sbr.rel (0) target = $region45
    $region44: #{tpu_custom_call.1} parent=1 // pred_region
      %91 = dma.done [#allocation9], 4096
    $region45: #{tpu_custom_call.1} parent=1 // pred_fallthru
      _
    // Predicated region
    $region46: #{tpu_custom_call.1} parent=1 // pred_check
      _
    $region47: #{tpu_custom_call.1} parent=1 // pred_check_branch
      %93 = sbr.rel (0) target = $region49
    $region48: #{tpu_custom_call.1} parent=1 // pred_region
      %94 = dma.done [#allocation9], 2048
    $region49: #{tpu_custom_call.1} parent=1 // pred_fallthru
      _
    %v95 = vld [vmem:[%s0] sm:$0xff]
    %v96 = vld [vmem:[%s0 + $0x8] sm:$0xff]
    %v97 = vld [vmem:[%s0 + $0x10] sm:$0xff]
    %v98 = vld [vmem:[%s0 + $0x18] sm:$0xff]
    %v99 = vld [vmem:[%s0 + $0x20] sm:$0xff]
    %v100 = vld [vmem:[%s0 + $0x28] sm:$0xff]
    %v101 = vld [vmem:[%s0 + $0x30] sm:$0xff]
    %v102 = vld [vmem:[%s0 + $0x38] sm:$0xff]
    %v103 = vld [vmem:[%s1] ss:$8 sm:$0x3]
    %105 = vset.pattern.permute.xlu0 0
    %106 = vperm.xlu0 %105, %v95
    %v107 = vpop.permute.xlu0 %106
    %110 = vset.pattern.permute.xlu0 0
    %111 = vperm.xlu0 %110, %v96
    %v112 = vpop.permute.xlu0 %111
    %115 = vset.pattern.permute.xlu0 0
    %116 = vperm.xlu0 %115, %v97
    %v117 = vpop.permute.xlu0 %116
    %120 = vset.pattern.permute.xlu0 0
    %121 = vperm.xlu0 %120, %v98
    %v122 = vpop.permute.xlu0 %121
    %125 = vset.pattern.permute.xlu0 0
    %126 = vperm.xlu0 %125, %v99
    %v127 = vpop.permute.xlu0 %126
    %130 = vset.pattern.permute.xlu0 0
    %131 = vperm.xlu0 %130, %v100
    %v132 = vpop.permute.xlu0 %131
    %135 = vset.pattern.permute.xlu0 0
    %136 = vperm.xlu0 %135, %v101
    %v137 = vpop.permute.xlu0 %136
    %140 = vset.pattern.permute.xlu0 0
    %141 = vperm.xlu0 %140, %v102
    %v142 = vpop.permute.xlu0 %141
    %v145 = vlaneseq
    %v146 = vshrl.u32 %v145, 7
    %v147 = vsub.s32 0, %v146
    %v148 = vrot.slane %v103, %v147
    %v149 = vlaneseq
    %v150 = vshrl.u32 %v149, 7
    %v151 = vsub.s32 1, %v150
    %v152 = vrot.slane %v103, %v151
    %v155 = vmul.f32 %v107, %v148
    %v156 = vmul.f32 %v107, %v152
    %v157 = vmul.f32 %v112, %v148
    %v158 = vmul.f32 %v112, %v152
    %v159 = vmul.f32 %v117, %v148
    %v160 = vmul.f32 %v117, %v152
    %v161 = vmul.f32 %v122, %v148
    %v162 = vmul.f32 %v122, %v152
    %v163 = vmul.f32 %v127, %v148
    %v164 = vmul.f32 %v127, %v152
    %v165 = vmul.f32 %v132, %v148
    %v166 = vmul.f32 %v132, %v152
    %v167 = vmul.f32 %v137, %v148
    %v168 = vmul.f32 %v137, %v152
    %v169 = vmul.f32 %v142, %v148
    %v170 = vmul.f32 %v142, %v152
    %s171 = scalar_lea.vmem %s1, 1
    %v172 = vld [vmem:[%s171] ss:$8 sm:$0x3]
    %v174 = vlaneseq
    %v175 = vshrl.u32 %v174, 7
    %v176 = vsub.s32 0, %v175
    %v177 = vrot.slane %v172, %v176
    %v178 = vlaneseq
    %v179 = vshrl.u32 %v178, 7
    %v180 = vsub.s32 1, %v179
    %v181 = vrot.slane %v172, %v180
    %v184 = vadd.f32 %v155, %v177
    %v185 = vadd.f32 %v156, %v181
    %v186 = vadd.f32 %v157, %v177
    %v187 = vadd.f32 %v158, %v181
    %v188 = vadd.f32 %v159, %v177
    %v189 = vadd.f32 %v160, %v181
    %v190 = vadd.f32 %v161, %v177
    %v191 = vadd.f32 %v162, %v181
    %v192 = vadd.f32 %v163, %v177
    %v193 = vadd.f32 %v164, %v181
    %v194 = vadd.f32 %v165, %v177
    %v195 = vadd.f32 %v166, %v181
    %v196 = vadd.f32 %v167, %v177
    %v197 = vadd.f32 %v168, %v181
    %v198 = vadd.f32 %v169, %v177
    %v199 = vadd.f32 %v170, %v181
    %s200 = scalar_lea.vmem %s1, 2
    %v201 = vld [vmem:[%s200] ss:$8 sm:$0x3]
    %s202 = scalar_lea.vmem %s1, 3
    %v203 = vld [vmem:[%s202] ss:$8 sm:$0x3]
    %v204 = vadd.f32 %v184, %v186
    %v205 = vadd.f32 %v204, %v188
    %v206 = vadd.f32 %v205, %v190
    %v207 = vadd.f32 %v206, %v192
    %v208 = vadd.f32 %v207, %v194
    %v209 = vadd.f32 %v208, %v196
    %v210 = vadd.f32 %v209, %v198
    %v211 = vrot.slane %v210, 4
    %v212 = vadd.f32 %v210, %v211
    %v213 = vrot.slane %v212, 2
    %v214 = vadd.f32 %v212, %v213
    %v215 = vrot.slane %v214, 1
    %v216 = vadd.f32 %v214, %v215
    %v217 = vadd.f32 %v185, %v187
    %v218 = vadd.f32 %v217, %v189
    %v219 = vadd.f32 %v218, %v191
    %v220 = vadd.f32 %v219, %v193
    %v221 = vadd.f32 %v220, %v195
    %v222 = vadd.f32 %v221, %v197
    %v223 = vadd.f32 %v222, %v199
    %v224 = vrot.slane %v223, 4
    %v225 = vadd.f32 %v223, %v224
    %v226 = vrot.slane %v225, 2
    %v227 = vadd.f32 %v225, %v226
    %v228 = vrot.slane %v227, 1
    %v229 = vadd.f32 %v227, %v228
    %v230 = vrcp.pop 64.0
    %v231 = vmul.f32 %v216, %v230
    %v232 = vmul.f32 %v229, %v230
    %v233 = vsub.f32 %v184, %v231
    %v234 = vsub.f32 %v185, %v232
    %v235 = vsub.f32 %v186, %v231
    %v236 = vsub.f32 %v187, %v232
    %v237 = vsub.f32 %v188, %v231
    %v238 = vsub.f32 %v189, %v232
    %v239 = vsub.f32 %v190, %v231
    %v240 = vsub.f32 %v191, %v232
    %v241 = vsub.f32 %v192, %v231
    %v242 = vsub.f32 %v193, %v232
    %v243 = vsub.f32 %v194, %v231
    %v244 = vsub.f32 %v195, %v232
    %v245 = vsub.f32 %v196, %v231
    %v246 = vsub.f32 %v197, %v232
    %v247 = vsub.f32 %v198, %v231
    %v248 = vsub.f32 %v199, %v232
    %v249 = vmul.f32 %v233, %v233
    %v250 = vmul.f32 %v234, %v234
    %v251 = vmul.f32 %v235, %v235
    %v252 = vmul.f32 %v236, %v236
    %v253 = vmul.f32 %v237, %v237
    %v254 = vmul.f32 %v238, %v238
    %v255 = vmul.f32 %v239, %v239
    %v256 = vmul.f32 %v240, %v240
    %v257 = vmul.f32 %v241, %v241
    %v258 = vmul.f32 %v242, %v242
    %v259 = vmul.f32 %v243, %v243
    %v260 = vmul.f32 %v244, %v244
    %v261 = vmul.f32 %v245, %v245
    %v262 = vmul.f32 %v246, %v246
    %v263 = vmul.f32 %v247, %v247
    %v264 = vmul.f32 %v248, %v248
    %v265 = vadd.f32 %v249, %v251
    %v266 = vadd.f32 %v265, %v253
    %v267 = vadd.f32 %v266, %v255
    %v268 = vadd.f32 %v267, %v257
    %v269 = vadd.f32 %v268, %v259
    %v270 = vadd.f32 %v269, %v261
    %v271 = vadd.f32 %v270, %v263
    %v272 = vrot.slane %v271, 4
    %v273 = vadd.f32 %v271, %v272
    %v274 = vrot.slane %v273, 2
    %v275 = vadd.f32 %v273, %v274
    %v276 = vrot.slane %v275, 1
    %v277 = vadd.f32 %v275, %v276
    %v278 = vadd.f32 %v250, %v252
    %v279 = vadd.f32 %v278, %v254
    %v280 = vadd.f32 %v279, %v256
    %v281 = vadd.f32 %v280, %v258
    %v282 = vadd.f32 %v281, %v260
    %v283 = vadd.f32 %v282, %v262
    %v284 = vadd.f32 %v283, %v264
    %v285 = vrot.slane %v284, 4
    %v286 = vadd.f32 %v284, %v285
    %v287 = vrot.slane %v286, 2
    %v288 = vadd.f32 %v286, %v287
    %v289 = vrot.slane %v288, 1
    %v290 = vadd.f32 %v288, %v289
    %v291 = vmul.f32 %v277, %v230
    %v292 = vmul.f32 %v290, %v230
    %v293 = vadd.f32 %v291, 1e-05
    %v294 = vadd.f32 %v292, 1e-05
    %v295 = vrsqrt.pop %v293
    %v296 = vrsqrt.pop %v294
    %v297 = vmul.f32 %v233, %v295
    %v298 = vmul.f32 %v234, %v296
    %v299 = vmul.f32 %v235, %v295
    %v300 = vmul.f32 %v236, %v296
    %v301 = vmul.f32 %v237, %v295
    %v302 = vmul.f32 %v238, %v296
    %v303 = vmul.f32 %v239, %v295
    %v304 = vmul.f32 %v240, %v296
    %v305 = vmul.f32 %v241, %v295
    %v306 = vmul.f32 %v242, %v296
    %v307 = vmul.f32 %v243, %v295
    %v308 = vmul.f32 %v244, %v296
    %v309 = vmul.f32 %v245, %v295
    %v310 = vmul.f32 %v246, %v296
    %v311 = vmul.f32 %v247, %v295
    %v312 = vmul.f32 %v248, %v296
    %v314 = vlaneseq
    %v315 = vshrl.u32 %v314, 7
    %v316 = vsub.s32 0, %v315
    %v317 = vrot.slane %v201, %v316
    %v318 = vlaneseq
    %v319 = vshrl.u32 %v318, 7
    %v320 = vsub.s32 1, %v319
    %v321 = vrot.slane %v201, %v320
    %v324 = vmul.f32 %v297, %v317
    %v325 = vmul.f32 %v298, %v321
    %v326 = vmul.f32 %v299, %v317
    %v327 = vmul.f32 %v300, %v321
    %v328 = vmul.f32 %v301, %v317
    %v329 = vmul.f32 %v302, %v321
    %v330 = vmul.f32 %v303, %v317
    %v331 = vmul.f32 %v304, %v321
    %v332 = vmul.f32 %v305, %v317
    %v333 = vmul.f32 %v306, %v321
    %v334 = vmul.f32 %v307, %v317
    %v335 = vmul.f32 %v308, %v321
    %v336 = vmul.f32 %v309, %v317
    %v337 = vmul.f32 %v310, %v321
    %v338 = vmul.f32 %v311, %v317
    %v339 = vmul.f32 %v312, %v321
    %v341 = vlaneseq
    %v342 = vshrl.u32 %v341, 7
    %v343 = vsub.s32 0, %v342
    %v344 = vrot.slane %v203, %v343
    %v345 = vlaneseq
    %v346 = vshrl.u32 %v345, 7
    %v347 = vsub.s32 1, %v346
    %v348 = vrot.slane %v203, %v347
    %v351 = vadd.f32 %v324, %v344
    %v352 = vadd.f32 %v325, %v348
    %v353 = vadd.f32 %v326, %v344
    %v354 = vadd.f32 %v327, %v348
    %v355 = vadd.f32 %v328, %v344
    %v356 = vadd.f32 %v329, %v348
    %v357 = vadd.f32 %v330, %v344
    %v358 = vadd.f32 %v331, %v348
    %v359 = vadd.f32 %v332, %v344
    %v360 = vadd.f32 %v333, %v348
    %v361 = vadd.f32 %v334, %v344
    %v362 = vadd.f32 %v335, %v348
    %v363 = vadd.f32 %v336, %v344
    %v364 = vadd.f32 %v337, %v348
    %v365 = vadd.f32 %v338, %v344
    %v366 = vadd.f32 %v339, %v348
    %v367 = vtanh.pop %v351
    %v368 = vtanh.pop %v352
    %v369 = vtanh.pop %v353
    %v370 = vtanh.pop %v354
    %v371 = vtanh.pop %v355
    %v372 = vtanh.pop %v356
    %v373 = vtanh.pop %v357
    %v374 = vtanh.pop %v358
    %v375 = vtanh.pop %v359
    %v376 = vtanh.pop %v360
    %v377 = vtanh.pop %v361
    %v378 = vtanh.pop %v362
    %v379 = vtanh.pop %v363
    %v380 = vtanh.pop %v364
    %v381 = vtanh.pop %v365
    %v382 = vtanh.pop %v366
    %s383 = scalar_lea.vmem %s1, 4
    %v384 = vld [vmem:[%s383] ss:$8 sm:$0x3]
    %v385 = vld [vmem:[#allocation2] sm:$0xff]
    %v386 = vld [vmem:[#allocation2 + $0x8] sm:$0xff]
    %v387 = vld [vmem:[#allocation2 + $0x10] sm:$0xff]
    %v388 = vld [vmem:[#allocation2 + $0x18] sm:$0xff]
    %v389 = vld [vmem:[#allocation2 + $0x20] sm:$0xff]
    %v390 = vld [vmem:[#allocation2 + $0x28] sm:$0xff]
    %v391 = vld [vmem:[#allocation2 + $0x30] sm:$0xff]
    %v392 = vld [vmem:[#allocation2 + $0x38] sm:$0xff]
    %v393 = vld [vmem:[#allocation2 + $0x40] sm:$0xff]
    %v394 = vld [vmem:[#allocation2 + $0x48] sm:$0xff]
    %v395 = vld [vmem:[#allocation2 + $0x50] sm:$0xff]
    %v396 = vld [vmem:[#allocation2 + $0x58] sm:$0xff]
    %v397 = vld [vmem:[#allocation2 + $0x60] sm:$0xff]
    %v398 = vld [vmem:[#allocation2 + $0x68] sm:$0xff]
    %v399 = vld [vmem:[#allocation2 + $0x70] sm:$0xff]
    %v400 = vld [vmem:[#allocation2 + $0x78] sm:$0xff]
    %v401 = vld [vmem:[#allocation2 + $0x80] sm:$0xff]
    %v402 = vld [vmem:[#allocation2 + $0x88] sm:$0xff]
    %v403 = vld [vmem:[#allocation2 + $0x90] sm:$0xff]
    %v404 = vld [vmem:[#allocation2 + $0x98] sm:$0xff]
    %v405 = vld [vmem:[#allocation2 + $0xa0] sm:$0xff]
    %v406 = vld [vmem:[#allocation2 + $0xa8] sm:$0xff]
    %v407 = vld [vmem:[#allocation2 + $0xb0] sm:$0xff]
    %v408 = vld [vmem:[#allocation2 + $0xb8] sm:$0xff]
    %v409 = vld [vmem:[#allocation2 + $0xc0] sm:$0xff]
    %v410 = vld [vmem:[#allocation2 + $0xc8] sm:$0xff]
    %v411 = vld [vmem:[#allocation2 + $0xd0] sm:$0xff]
    %v412 = vld [vmem:[#allocation2 + $0xd8] sm:$0xff]
    %v413 = vld [vmem:[#allocation2 + $0xe0] sm:$0xff]
    %v414 = vld [vmem:[#allocation2 + $0xe8] sm:$0xff]
    %v415 = vld [vmem:[#allocation2 + $0xf0] sm:$0xff]
    %v416 = vld [vmem:[#allocation2 + $0xf8] sm:$0xff]
    %v417 = vld [vmem:[#allocation2 + $0x100] sm:$0xff]
    %v418 = vld [vmem:[#allocation2 + $0x108] sm:$0xff]
    %v419 = vld [vmem:[#allocation2 + $0x110] sm:$0xff]
    %v420 = vld [vmem:[#allocation2 + $0x118] sm:$0xff]
    %v421 = vld [vmem:[#allocation2 + $0x120] sm:$0xff]
    %v422 = vld [vmem:[#allocation2 + $0x128] sm:$0xff]
    %v423 = vld [vmem:[#allocation2 + $0x130] sm:$0xff]
    %v424 = vld [vmem:[#allocation2 + $0x138] sm:$0xff]
    %v425 = vld [vmem:[#allocation2 + $0x140] sm:$0xff]
    %v426 = vld [vmem:[#allocation2 + $0x148] sm:$0xff]
    %v427 = vld [vmem:[#allocation2 + $0x150] sm:$0xff]
    %v428 = vld [vmem:[#allocation2 + $0x158] sm:$0xff]
    %v429 = vld [vmem:[#allocation2 + $0x160] sm:$0xff]
    %v430 = vld [vmem:[#allocation2 + $0x168] sm:$0xff]
    %v431 = vld [vmem:[#allocation2 + $0x170] sm:$0xff]
    %v432 = vld [vmem:[#allocation2 + $0x178] sm:$0xff]
    %v433 = vld [vmem:[#allocation2 + $0x180] sm:$0xff]
    %v434 = vld [vmem:[#allocation2 + $0x188] sm:$0xff]
    %v435 = vld [vmem:[#allocation2 + $0x190] sm:$0xff]
    %v436 = vld [vmem:[#allocation2 + $0x198] sm:$0xff]
    %v437 = vld [vmem:[#allocation2 + $0x1a0] sm:$0xff]
    %v438 = vld [vmem:[#allocation2 + $0x1a8] sm:$0xff]
    %v439 = vld [vmem:[#allocation2 + $0x1b0] sm:$0xff]
    %v440 = vld [vmem:[#allocation2 + $0x1b8] sm:$0xff]
    %v441 = vld [vmem:[#allocation2 + $0x1c0] sm:$0xff]
    %v442 = vld [vmem:[#allocation2 + $0x1c8] sm:$0xff]
    %v443 = vld [vmem:[#allocation2 + $0x1d0] sm:$0xff]
    %v444 = vld [vmem:[#allocation2 + $0x1d8] sm:$0xff]
    %v445 = vld [vmem:[#allocation2 + $0x1e0] sm:$0xff]
    %v446 = vld [vmem:[#allocation2 + $0x1e8] sm:$0xff]
    %v447 = vld [vmem:[#allocation2 + $0x1f0] sm:$0xff]
    %v448 = vld [vmem:[#allocation2 + $0x1f8] sm:$0xff]
    %v450 = vlaneseq
    %v451 = vshrl.u32 %v450, 7
    %v452 = vsub.s32 0, %v451
    %v453 = vrot.slane %v384, %v452
    %v454 = vlaneseq
    %v455 = vshrl.u32 %v454, 7
    %v456 = vsub.s32 1, %v455
    %v457 = vrot.slane %v384, %v456
    %460 = vmatprep.subr.mxu0 %v386
    %461 = vmatpush1.msra.mxu0 %v385
    %462 = vmatprep.subr.mxu0 %v388
    %463 = vmatpush1.msra.mxu0 %v387
    %464 = vmatprep.subr.mxu0 %v390
    %465 = vmatpush1.msra.mxu0 %v389
    %466 = vmatprep.subr.mxu0 %v392
    %467 = vmatpush1.msra.mxu0 %v391
    %468 = vmatprep.subr.mxu0 %v394
    %469 = vmatpush1.msra.mxu0 %v393
    %470 = vmatprep.subr.mxu0 %v396
    %471 = vmatpush1.msra.mxu0 %v395
    %472 = vmatprep.subr.mxu0 %v398
    %473 = vmatpush1.msra.mxu0 %v397
    %474 = vmatprep.subr.mxu0 %v400
    %475 = vmatpush1.msra.mxu0 %v399
    %476 = vmatprep.subr.mxu0 %v402
    %477 = vmatpush1.msra.mxu0 %v401
    %478 = vmatprep.subr.mxu0 %v404
    %479 = vmatpush1.msra.mxu0 %v403
    %480 = vmatprep.subr.mxu0 %v406
    %481 = vmatpush1.msra.mxu0 %v405
    %482 = vmatprep.subr.mxu0 %v408
    %483 = vmatpush1.msra.mxu0 %v407
    %484 = vmatprep.subr.mxu0 %v410
    %485 = vmatpush1.msra.mxu0 %v409
    %486 = vmatprep.subr.mxu0 %v412
    %487 = vmatpush1.msra.mxu0 %v411
    %488 = vmatprep.subr.mxu0 %v414
    %489 = vmatpush1.msra.mxu0 %v413
    %490 = vmatprep.subr.mxu0 %v416
    %491 = vmatpush1.msra.mxu0 %v415
    %492 = vmatprep.subr.mxu0 %v418
    %493 = vmatpush1.msra.mxu0 %v417
    %494 = vmatprep.subr.mxu0 %v420
    %495 = vmatpush1.msra.mxu0 %v419
    %496 = vmatprep.subr.mxu0 %v422
    %497 = vmatpush1.msra.mxu0 %v421
    %498 = vmatprep.subr.mxu0 %v424
    %499 = vmatpush1.msra.mxu0 %v423
    %500 = vmatprep.subr.mxu0 %v426
    %501 = vmatpush1.msra.mxu0 %v425
    %502 = vmatprep.subr.mxu0 %v428
    %503 = vmatpush1.msra.mxu0 %v427
    %504 = vmatprep.subr.mxu0 %v430
    %505 = vmatpush1.msra.mxu0 %v429
    %506 = vmatprep.subr.mxu0 %v432
    %507 = vmatpush1.msra.mxu0 %v431
    %508 = vmatprep.subr.mxu0 %v434
    %509 = vmatpush1.msra.mxu0 %v433
    %510 = vmatprep.subr.mxu0 %v436
    %511 = vmatpush1.msra.mxu0 %v435
    %512 = vmatprep.subr.mxu0 %v438
    %513 = vmatpush1.msra.mxu0 %v437
    %514 = vmatprep.subr.mxu0 %v440
    %515 = vmatpush1.msra.mxu0 %v439
    %516 = vmatprep.subr.mxu0 %v442
    %517 = vmatpush1.msra.mxu0 %v441
    %518 = vmatprep.subr.mxu0 %v444
    %519 = vmatpush1.msra.mxu0 %v443
    %520 = vmatprep.subr.mxu0 %v446
    %521 = vmatpush1.msra.mxu0 %v445
    %522 = vmatprep.subr.mxu0 %v448
    %523 = vmatpush1.msra.mxu0 %v447
    %524 = vmatprep.mubr.f32.mxu0 %v368
    %525 = vmatmul.mubr.f32.gmra.mrb[0].mxu0 %v367
    %v526 = vpop.f32.mrb[0].mxu0
    %v527 = vadd.f32 %v453, %v526
    %v528 = vpop.f32.mrb[0].mxu0
    %v529 = vadd.f32 %v457, %v528
    %530 = vmatprep.mubr.f32.mxu0 %v370
    %531 = vmatmul.mubr.f32.gmra.mrb[0].mxu0 %v369
    %v532 = vpop.f32.mrb[0].mxu0
    %v533 = vadd.f32 %v453, %v532
    %v534 = vpop.f32.mrb[0].mxu0
    %v535 = vadd.f32 %v457, %v534
    %536 = vmatprep.mubr.f32.mxu0 %v372
    %537 = vmatmul.mubr.f32.gmra.mrb[0].mxu0 %v371
    %v538 = vpop.f32.mrb[0].mxu0
    %v539 = vadd.f32 %v453, %v538
    %v540 = vpop.f32.mrb[0].mxu0
    %v541 = vadd.f32 %v457, %v540
    %542 = vmatprep.mubr.f32.mxu0 %v374
    %543 = vmatmul.mubr.f32.gmra.mrb[0].mxu0 %v373
    %v544 = vpop.f32.mrb[0].mxu0
    %v545 = vadd.f32 %v453, %v544
    %v546 = vpop.f32.mrb[0].mxu0
    %v547 = vadd.f32 %v457, %v546
    %548 = vmatprep.mubr.f32.mxu0 %v376
    %549 = vmatmul.mubr.f32.gmra.mrb[0].mxu0 %v375
    %v550 = vpop.f32.mrb[0].mxu0
    %v551 = vadd.f32 %v453, %v550
    %v552 = vpop.f32.mrb[0].mxu0
    %v553 = vadd.f32 %v457, %v552
    %554 = vmatprep.mubr.f32.mxu0 %v378
    %555 = vmatmul.mubr.f32.gmra.mrb[0].mxu0 %v377
    %v556 = vpop.f32.mrb[0].mxu0
    %v557 = vadd.f32 %v453, %v556
    %v558 = vpop.f32.mrb[0].mxu0
    %v559 = vadd.f32 %v457, %v558
    %560 = vmatprep.mubr.f32.mxu0 %v380
    %561 = vmatmul.mubr.f32.gmra.mrb[0].mxu0 %v379
    %v562 = vpop.f32.mrb[0].mxu0
    %v563 = vadd.f32 %v453, %v562
    %v564 = vpop.f32.mrb[0].mxu0
    %v565 = vadd.f32 %v457, %v564
    %566 = vmatprep.mubr.f32.mxu0 %v382
    %567 = vmatmul.mubr.f32.gmra.mrb[0].mxu0 %v381
    %v568 = vpop.f32.mrb[0].mxu0
    %v569 = vadd.f32 %v453, %v568
    %v570 = vpop.f32.mrb[0].mxu0
    %v571 = vadd.f32 %v457, %v570
    %572 = vdwg.mxu0
    %s573 = scalar_lea.vmem %s1, 5
    %v574 = vld [vmem:[%s573] ss:$8 sm:$0x3]
    %s575 = scalar_lea.vmem %s1, 6
    %v576 = vld [vmem:[%s575] ss:$8 sm:$0x3]
    %v577 = vadd.f32 %v527, %v533
    %v578 = vadd.f32 %v577, %v539
    %v579 = vadd.f32 %v578, %v545
    %v580 = vadd.f32 %v579, %v551
    %v581 = vadd.f32 %v580, %v557
    %v582 = vadd.f32 %v581, %v563
    %v583 = vadd.f32 %v582, %v569
    %v584 = vrot.slane %v583, 4
    %v585 = vadd.f32 %v583, %v584
    %v586 = vrot.slane %v585, 2
    %v587 = vadd.f32 %v585, %v586
    %v588 = vrot.slane %v587, 1
    %v589 = vadd.f32 %v587, %v588
    %v590 = vadd.f32 %v529, %v535
    %v591 = vadd.f32 %v590, %v541
    %v592 = vadd.f32 %v591, %v547
    %v593 = vadd.f32 %v592, %v553
    %v594 = vadd.f32 %v593, %v559
    %v595 = vadd.f32 %v594, %v565
    %v596 = vadd.f32 %v595, %v571
    %v597 = vrot.slane %v596, 4
    %v598 = vadd.f32 %v596, %v597
    %v599 = vrot.slane %v598, 2
    %v600 = vadd.f32 %v598, %v599
    %v601 = vrot.slane %v600, 1
    %v602 = vadd.f32 %v600, %v601
    %v603 = vmul.f32 %v589, %v230
    %v604 = vmul.f32 %v602, %v230
    %v605 = vsub.f32 %v527, %v603
    %v606 = vsub.f32 %v529, %v604
    %v607 = vsub.f32 %v533, %v603
    %v608 = vsub.f32 %v535, %v604
    %v609 = vsub.f32 %v539, %v603
    %v610 = vsub.f32 %v541, %v604
    %v611 = vsub.f32 %v545, %v603
    %v612 = vsub.f32 %v547, %v604
    %v613 = vsub.f32 %v551, %v603
    %v614 = vsub.f32 %v553, %v604
    %v615 = vsub.f32 %v557, %v603
    %v616 = vsub.f32 %v559, %v604
    %v617 = vsub.f32 %v563, %v603
    %v618 = vsub.f32 %v565, %v604
    %v619 = vsub.f32 %v569, %v603
    %v620 = vsub.f32 %v571, %v604
    %v621 = vmul.f32 %v605, %v605
    %v622 = vmul.f32 %v606, %v606
    %v623 = vmul.f32 %v607, %v607
    %v624 = vmul.f32 %v608, %v608
    %v625 = vmul.f32 %v609, %v609
    %v626 = vmul.f32 %v610, %v610
    %v627 = vmul.f32 %v611, %v611
    %v628 = vmul.f32 %v612, %v612
    %v629 = vmul.f32 %v613, %v613
    %v630 = vmul.f32 %v614, %v614
    %v631 = vmul.f32 %v615, %v615
    %v632 = vmul.f32 %v616, %v616
    %v633 = vmul.f32 %v617, %v617
    %v634 = vmul.f32 %v618, %v618
    %v635 = vmul.f32 %v619, %v619
    %v636 = vmul.f32 %v620, %v620
    %v637 = vadd.f32 %v621, %v623
    %v638 = vadd.f32 %v637, %v625
    %v639 = vadd.f32 %v638, %v627
    %v640 = vadd.f32 %v639, %v629
    %v641 = vadd.f32 %v640, %v631
    %v642 = vadd.f32 %v641, %v633
    %v643 = vadd.f32 %v642, %v635
    %v644 = vrot.slane %v643, 4
    %v645 = vadd.f32 %v643, %v644
    %v646 = vrot.slane %v645, 2
    %v647 = vadd.f32 %v645, %v646
    %v648 = vrot.slane %v647, 1
    %v649 = vadd.f32 %v647, %v648
    %v650 = vadd.f32 %v622, %v624
    %v651 = vadd.f32 %v650, %v626
    %v652 = vadd.f32 %v651, %v628
    %v653 = vadd.f32 %v652, %v630
    %v654 = vadd.f32 %v653, %v632
    %v655 = vadd.f32 %v654, %v634
    %v656 = vadd.f32 %v655, %v636
    %v657 = vrot.slane %v656, 4
    %v658 = vadd.f32 %v656, %v657
    %v659 = vrot.slane %v658, 2
    %v660 = vadd.f32 %v658, %v659
    %v661 = vrot.slane %v660, 1
    %v662 = vadd.f32 %v660, %v661
    %v663 = vmul.f32 %v649, %v230
    %v664 = vmul.f32 %v662, %v230
    %v665 = vadd.f32 %v663, 1e-05
    %v666 = vadd.f32 %v664, 1e-05
    %v667 = vrsqrt.pop %v665
    %v668 = vrsqrt.pop %v666
    %v669 = vmul.f32 %v605, %v667
    %v670 = vmul.f32 %v606, %v668
    %v671 = vmul.f32 %v607, %v667
    %v672 = vmul.f32 %v608, %v668
    %v673 = vmul.f32 %v609, %v667
    %v674 = vmul.f32 %v610, %v668
    %v675 = vmul.f32 %v611, %v667
    %v676 = vmul.f32 %v612, %v668
    %v677 = vmul.f32 %v613, %v667
    %v678 = vmul.f32 %v614, %v668
    %v679 = vmul.f32 %v615, %v667
    %v680 = vmul.f32 %v616, %v668
    %v681 = vmul.f32 %v617, %v667
    %v682 = vmul.f32 %v618, %v668
    %v683 = vmul.f32 %v619, %v667
    %v684 = vmul.f32 %v620, %v668
    %v686 = vlaneseq
    %v687 = vshrl.u32 %v686, 7
    %v688 = vsub.s32 0, %v687
    %v689 = vrot.slane %v574, %v688
    %v690 = vlaneseq
    %v691 = vshrl.u32 %v690, 7
    %v692 = vsub.s32 1, %v691
    %v693 = vrot.slane %v574, %v692
    %v696 = vmul.f32 %v669, %v689
    %v697 = vmul.f32 %v670, %v693
    %v698 = vmul.f32 %v671, %v689
    %v699 = vmul.f32 %v672, %v693
    %v700 = vmul.f32 %v673, %v689
    %v701 = vmul.f32 %v674, %v693
    %v702 = vmul.f32 %v675, %v689
    %v703 = vmul.f32 %v676, %v693
    %v704 = vmul.f32 %v677, %v689
    %v705 = vmul.f32 %v678, %v693
    %v706 = vmul.f32 %v679, %v689
    %v707 = vmul.f32 %v680, %v693
    %v708 = vmul.f32 %v681, %v689
    %v709 = vmul.f32 %v682, %v693
    %v710 = vmul.f32 %v683, %v689
    %v711 = vmul.f32 %v684, %v693
    %v713 = vlaneseq
    %v714 = vshrl.u32 %v713, 7
    %v715 = vsub.s32 0, %v714
    %v716 = vrot.slane %v576, %v715
    %v717 = vlaneseq
    %v718 = vshrl.u32 %v717, 7
    %v719 = vsub.s32 1, %v718
    %v720 = vrot.slane %v576, %v719
    %v723 = vadd.f32 %v696, %v716
    %v724 = vadd.f32 %v697, %v720
    %v725 = vadd.f32 %v698, %v716
    %v726 = vadd.f32 %v699, %v720
    %v727 = vadd.f32 %v700, %v716
    %v728 = vadd.f32 %v701, %v720
    %v729 = vadd.f32 %v702, %v716
    %v730 = vadd.f32 %v703, %v720
    %v731 = vadd.f32 %v704, %v716
    %v732 = vadd.f32 %v705, %v720
    %v733 = vadd.f32 %v706, %v716
    %v734 = vadd.f32 %v707, %v720
    %v735 = vadd.f32 %v708, %v716
    %v736 = vadd.f32 %v709, %v720
    %v737 = vadd.f32 %v710, %v716
    %v738 = vadd.f32 %v711, %v720
    %v739 = vtanh.pop %v723
    %v740 = vtanh.pop %v724
    %v741 = vtanh.pop %v725
    %v742 = vtanh.pop %v726
    %v743 = vtanh.pop %v727
    %v744 = vtanh.pop %v728
    %v745 = vtanh.pop %v729
    %v746 = vtanh.pop %v730
    %v747 = vtanh.pop %v731
    %v748 = vtanh.pop %v732
    %v749 = vtanh.pop %v733
    %v750 = vtanh.pop %v734
    %v751 = vtanh.pop %v735
    %v752 = vtanh.pop %v736
    %v753 = vtanh.pop %v737
    %v754 = vtanh.pop %v738
    %s755 = scalar_lea.vmem %s1, 7
    %v756 = vld [vmem:[%s755] ss:$8 sm:$0x3]
    %v757 = vld [vmem:[#allocation5] sm:$0xff]
    %v758 = vld [vmem:[#allocation5 + $0x8] sm:$0xff]
    %v759 = vld [vmem:[#allocation5 + $0x10] sm:$0xff]
    %v760 = vld [vmem:[#allocation5 + $0x18] sm:$0xff]
    %v761 = vld [vmem:[#allocation5 + $0x20] sm:$0xff]
    %v762 = vld [vmem:[#allocation5 + $0x28] sm:$0xff]
    %v763 = vld [vmem:[#allocation5 + $0x30] sm:$0xff]
    %v764 = vld [vmem:[#allocation5 + $0x38] sm:$0xff]
    %v765 = vld [vmem:[#allocation5 + $0x40] sm:$0xff]
    %v766 = vld [vmem:[#allocation5 + $0x48] sm:$0xff]
    %v767 = vld [vmem:[#allocation5 + $0x50] sm:$0xff]
    %v768 = vld [vmem:[#allocation5 + $0x58] sm:$0xff]
    %v769 = vld [vmem:[#allocation5 + $0x60] sm:$0xff]
    %v770 = vld [vmem:[#allocation5 + $0x68] sm:$0xff]
    %v771 = vld [vmem:[#allocation5 + $0x70] sm:$0xff]
    %v772 = vld [vmem:[#allocation5 + $0x78] sm:$0xff]
    %v773 = vld [vmem:[#allocation5 + $0x80] sm:$0xff]
    %v774 = vld [vmem:[#allocation5 + $0x88] sm:$0xff]
    %v775 = vld [vmem:[#allocation5 + $0x90] sm:$0xff]
    %v776 = vld [vmem:[#allocation5 + $0x98] sm:$0xff]
    %v777 = vld [vmem:[#allocation5 + $0xa0] sm:$0xff]
    %v778 = vld [vmem:[#allocation5 + $0xa8] sm:$0xff]
    %v779 = vld [vmem:[#allocation5 + $0xb0] sm:$0xff]
    %v780 = vld [vmem:[#allocation5 + $0xb8] sm:$0xff]
    %v781 = vld [vmem:[#allocation5 + $0xc0] sm:$0xff]
    %v782 = vld [vmem:[#allocation5 + $0xc8] sm:$0xff]
    %v783 = vld [vmem:[#allocation5 + $0xd0] sm:$0xff]
    %v784 = vld [vmem:[#allocation5 + $0xd8] sm:$0xff]
    %v785 = vld [vmem:[#allocation5 + $0xe0] sm:$0xff]
    %v786 = vld [vmem:[#allocation5 + $0xe8] sm:$0xff]
    %v787 = vld [vmem:[#allocation5 + $0xf0] sm:$0xff]
    %v788 = vld [vmem:[#allocation5 + $0xf8] sm:$0xff]
    %v789 = vld [vmem:[#allocation5 + $0x100] sm:$0xff]
    %v790 = vld [vmem:[#allocation5 + $0x108] sm:$0xff]
    %v791 = vld [vmem:[#allocation5 + $0x110] sm:$0xff]
    %v792 = vld [vmem:[#allocation5 + $0x118] sm:$0xff]
    %v793 = vld [vmem:[#allocation5 + $0x120] sm:$0xff]
    %v794 = vld [vmem:[#allocation5 + $0x128] sm:$0xff]
    %v795 = vld [vmem:[#allocation5 + $0x130] sm:$0xff]
    %v796 = vld [vmem:[#allocation5 + $0x138] sm:$0xff]
    %v797 = vld [vmem:[#allocation5 + $0x140] sm:$0xff]
    %v798 = vld [vmem:[#allocation5 + $0x148] sm:$0xff]
    %v799 = vld [vmem:[#allocation5 + $0x150] sm:$0xff]
    %v800 = vld [vmem:[#allocation5 + $0x158] sm:$0xff]
    %v801 = vld [vmem:[#allocation5 + $0x160] sm:$0xff]
    %v802 = vld [vmem:[#allocation5 + $0x168] sm:$0xff]
    %v803 = vld [vmem:[#allocation5 + $0x170] sm:$0xff]
    %v804 = vld [vmem:[#allocation5 + $0x178] sm:$0xff]
    %v805 = vld [vmem:[#allocation5 + $0x180] sm:$0xff]
    %v806 = vld [vmem:[#allocation5 + $0x188] sm:$0xff]
    %v807 = vld [vmem:[#allocation5 + $0x190] sm:$0xff]
    %v808 = vld [vmem:[#allocation5 + $0x198] sm:$0xff]
    %v809 = vld [vmem:[#allocation5 + $0x1a0] sm:$0xff]
    %v810 = vld [vmem:[#allocation5 + $0x1a8] sm:$0xff]
    %v811 = vld [vmem:[#allocation5 + $0x1b0] sm:$0xff]
    %v812 = vld [vmem:[#allocation5 + $0x1b8] sm:$0xff]
    %v813 = vld [vmem:[#allocation5 + $0x1c0] sm:$0xff]
    %v814 = vld [vmem:[#allocation5 + $0x1c8] sm:$0xff]
    %v815 = vld [vmem:[#allocation5 + $0x1d0] sm:$0xff]
    %v816 = vld [vmem:[#allocation5 + $0x1d8] sm:$0xff]
    %v817 = vld [vmem:[#allocation5 + $0x1e0] sm:$0xff]
    %v818 = vld [vmem:[#allocation5 + $0x1e8] sm:$0xff]
    %v819 = vld [vmem:[#allocation5 + $0x1f0] sm:$0xff]
    %v820 = vld [vmem:[#allocation5 + $0x1f8] sm:$0xff]
    %v822 = vlaneseq
    %v823 = vshrl.u32 %v822, 7
    %v824 = vsub.s32 0, %v823
    %v825 = vrot.slane %v756, %v824
    %v826 = vlaneseq
    %v827 = vshrl.u32 %v826, 7
    %v828 = vsub.s32 1, %v827
    %v829 = vrot.slane %v756, %v828
    %832 = vmatprep.subr.mxu0 %v758
    %833 = vmatpush1.msra.mxu0 %v757
    %834 = vmatprep.subr.mxu0 %v760
    %835 = vmatpush1.msra.mxu0 %v759
    %836 = vmatprep.subr.mxu0 %v762
    %837 = vmatpush1.msra.mxu0 %v761
    %838 = vmatprep.subr.mxu0 %v764
    %839 = vmatpush1.msra.mxu0 %v763
    %840 = vmatprep.subr.mxu0 %v766
    %841 = vmatpush1.msra.mxu0 %v765
    %842 = vmatprep.subr.mxu0 %v768
    %843 = vmatpush1.msra.mxu0 %v767
    %844 = vmatprep.subr.mxu0 %v770
    %845 = vmatpush1.msra.mxu0 %v769
    %846 = vmatprep.subr.mxu0 %v772
    %847 = vmatpush1.msra.mxu0 %v771
    %848 = vmatprep.subr.mxu0 %v774
    %849 = vmatpush1.msra.mxu0 %v773
    %850 = vmatprep.subr.mxu0 %v776
    %851 = vmatpush1.msra.mxu0 %v775
    %852 = vmatprep.subr.mxu0 %v778
    %853 = vmatpush1.msra.mxu0 %v777
    %854 = vmatprep.subr.mxu0 %v780
    %855 = vmatpush1.msra.mxu0 %v779
    %856 = vmatprep.subr.mxu0 %v782
    %857 = vmatpush1.msra.mxu0 %v781
    %858 = vmatprep.subr.mxu0 %v784
    %859 = vmatpush1.msra.mxu0 %v783
    %860 = vmatprep.subr.mxu0 %v786
    %861 = vmatpush1.msra.mxu0 %v785
    %862 = vmatprep.subr.mxu0 %v788
    %863 = vmatpush1.msra.mxu0 %v787
    %864 = vmatprep.subr.mxu0 %v790
    %865 = vmatpush1.msra.mxu0 %v789
    %866 = vmatprep.subr.mxu0 %v792
    %867 = vmatpush1.msra.mxu0 %v791
    %868 = vmatprep.subr.mxu0 %v794
    %869 = vmatpush1.msra.mxu0 %v793
    %870 = vmatprep.subr.mxu0 %v796
    %871 = vmatpush1.msra.mxu0 %v795
    %872 = vmatprep.subr.mxu0 %v798
    %873 = vmatpush1.msra.mxu0 %v797
    %874 = vmatprep.subr.mxu0 %v800
    %875 = vmatpush1.msra.mxu0 %v799
    %876 = vmatprep.subr.mxu0 %v802
    %877 = vmatpush1.msra.mxu0 %v801
    %878 = vmatprep.subr.mxu0 %v804
    %879 = vmatpush1.msra.mxu0 %v803
    %880 = vmatprep.subr.mxu0 %v806
    %881 = vmatpush1.msra.mxu0 %v805
    %882 = vmatprep.subr.mxu0 %v808
    %883 = vmatpush1.msra.mxu0 %v807
    %884 = vmatprep.subr.mxu0 %v810
    %885 = vmatpush1.msra.mxu0 %v809
    %886 = vmatprep.subr.mxu0 %v812
    %887 = vmatpush1.msra.mxu0 %v811
    %888 = vmatprep.subr.mxu0 %v814
    %889 = vmatpush1.msra.mxu0 %v813
    %890 = vmatprep.subr.mxu0 %v816
    %891 = vmatpush1.msra.mxu0 %v815
    %892 = vmatprep.subr.mxu0 %v818
    %893 = vmatpush1.msra.mxu0 %v817
    %894 = vmatprep.subr.mxu0 %v820
    %895 = vmatpush1.msra.mxu0 %v819
    %896 = vmatprep.mubr.f32.mxu0 %v740
    %897 = vmatmul.mubr.f32.gmra.mrb[0].mxu0 %v739
    %v898 = vpop.f32.mrb[0].mxu0
    %v899 = vadd.f32 %v825, %v898
    %v900 = vpop.f32.mrb[0].mxu0
    %v901 = vadd.f32 %v829, %v900
    %902 = vmatprep.mubr.f32.mxu0 %v742
    %903 = vmatmul.mubr.f32.gmra.mrb[0].mxu0 %v741
    %v904 = vpop.f32.mrb[0].mxu0
    %v905 = vadd.f32 %v825, %v904
    %v906 = vpop.f32.mrb[0].mxu0
    %v907 = vadd.f32 %v829, %v906
    %908 = vmatprep.mubr.f32.mxu0 %v744
    %909 = vmatmul.mubr.f32.gmra.mrb[0].mxu0 %v743
    %v910 = vpop.f32.mrb[0].mxu0
    %v911 = vadd.f32 %v825, %v910
    %v912 = vpop.f32.mrb[0].mxu0
    %v913 = vadd.f32 %v829, %v912
    %914 = vmatprep.mubr.f32.mxu0 %v746
    %915 = vmatmul.mubr.f32.gmra.mrb[0].mxu0 %v745
    %v916 = vpop.f32.mrb[0].mxu0
    %v917 = vadd.f32 %v825, %v916
    %v918 = vpop.f32.mrb[0].mxu0
    %v919 = vadd.f32 %v829, %v918
    %920 = vmatprep.mubr.f32.mxu0 %v748
    %921 = vmatmul.mubr.f32.gmra.mrb[0].mxu0 %v747
    %v922 = vpop.f32.mrb[0].mxu0
    %v923 = vadd.f32 %v825, %v922
    %v924 = vpop.f32.mrb[0].mxu0
    %v925 = vadd.f32 %v829, %v924
    %926 = vmatprep.mubr.f32.mxu0 %v750
    %927 = vmatmul.mubr.f32.gmra.mrb[0].mxu0 %v749
    %v928 = vpop.f32.mrb[0].mxu0
    %v929 = vadd.f32 %v825, %v928
    %v930 = vpop.f32.mrb[0].mxu0
    %v931 = vadd.f32 %v829, %v930
    %932 = vmatprep.mubr.f32.mxu0 %v752
    %933 = vmatmul.mubr.f32.gmra.mrb[0].mxu0 %v751
    %v934 = vpop.f32.mrb[0].mxu0
    %v935 = vadd.f32 %v825, %v934
    %v936 = vpop.f32.mrb[0].mxu0
    %v937 = vadd.f32 %v829, %v936
    %938 = vmatprep.mubr.f32.mxu0 %v754
    %939 = vmatmul.mubr.f32.gmra.mrb[0].mxu0 %v753
    %v940 = vpop.f32.mrb[0].mxu0
    %v941 = vadd.f32 %v825, %v940
    %v942 = vpop.f32.mrb[0].mxu0
    %v943 = vadd.f32 %v829, %v942
    %944 = vdwg.mxu0
    %s945 = scalar_lea.vmem %s1, 16
    %v946 = vld [vmem:[%s945] ss:$8 sm:$0x3]
    %s947 = scalar_lea.vmem %s1, 17
    %v948 = vld [vmem:[%s947] ss:$8 sm:$0x3]
    %v949 = vadd.f32 %v899, %v905
    %v950 = vadd.f32 %v949, %v911
    %v951 = vadd.f32 %v950, %v917
    %v952 = vadd.f32 %v951, %v923
    %v953 = vadd.f32 %v952, %v929
    %v954 = vadd.f32 %v953, %v935
    %v955 = vadd.f32 %v954, %v941
    %v956 = vrot.slane %v955, 4
    %v957 = vadd.f32 %v955, %v956
    %v958 = vrot.slane %v957, 2
    %v959 = vadd.f32 %v957, %v958
    %v960 = vrot.slane %v959, 1
    %v961 = vadd.f32 %v959, %v960
    %v962 = vadd.f32 %v901, %v907
    %v963 = vadd.f32 %v962, %v913
    %v964 = vadd.f32 %v963, %v919
    %v965 = vadd.f32 %v964, %v925
    %v966 = vadd.f32 %v965, %v931
    %v967 = vadd.f32 %v966, %v937
    %v968 = vadd.f32 %v967, %v943
    %v969 = vrot.slane %v968, 4
    %v970 = vadd.f32 %v968, %v969
    %v971 = vrot.slane %v970, 2
    %v972 = vadd.f32 %v970, %v971
    %v973 = vrot.slane %v972, 1
    %v974 = vadd.f32 %v972, %v973
    %v975 = vmul.f32 %v961, %v230
    %v976 = vmul.f32 %v974, %v230
    %v977 = vsub.f32 %v899, %v975
    %v978 = vsub.f32 %v901, %v976
    %v979 = vsub.f32 %v905, %v975
    %v980 = vsub.f32 %v907, %v976
    %v981 = vsub.f32 %v911, %v975
    %v982 = vsub.f32 %v913, %v976
    %v983 = vsub.f32 %v917, %v975
    %v984 = vsub.f32 %v919, %v976
    %v985 = vsub.f32 %v923, %v975
    %v986 = vsub.f32 %v925, %v976
    %v987 = vsub.f32 %v929, %v975
    %v988 = vsub.f32 %v931, %v976
    %v989 = vsub.f32 %v935, %v975
    %v990 = vsub.f32 %v937, %v976
    %v991 = vsub.f32 %v941, %v975
    %v992 = vsub.f32 %v943, %v976
    %v993 = vmul.f32 %v977, %v977
    %v994 = vmul.f32 %v978, %v978
    %v995 = vmul.f32 %v979, %v979
    %v996 = vmul.f32 %v980, %v980
    %v997 = vmul.f32 %v981, %v981
    %v998 = vmul.f32 %v982, %v982
    %v999 = vmul.f32 %v983, %v983
    %v1000 = vmul.f32 %v984, %v984
    %v1001 = vmul.f32 %v985, %v985
    %v1002 = vmul.f32 %v986, %v986
    %v1003 = vmul.f32 %v987, %v987
    %v1004 = vmul.f32 %v988, %v988
    %v1005 = vmul.f32 %v989, %v989
    %v1006 = vmul.f32 %v990, %v990
    %v1007 = vmul.f32 %v991, %v991
    %v1008 = vmul.f32 %v992, %v992
    %v1009 = vadd.f32 %v993, %v995
    %v1010 = vadd.f32 %v1009, %v997
    %v1011 = vadd.f32 %v1010, %v999
    %v1012 = vadd.f32 %v1011, %v1001
    %v1013 = vadd.f32 %v1012, %v1003
    %v1014 = vadd.f32 %v1013, %v1005
    %v1015 = vadd.f32 %v1014, %v1007
    %v1016 = vrot.slane %v1015, 4
    %v1017 = vadd.f32 %v1015, %v1016
    %v1018 = vrot.slane %v1017, 2
    %v1019 = vadd.f32 %v1017, %v1018
    %v1020 = vrot.slane %v1019, 1
    %v1021 = vadd.f32 %v1019, %v1020
    %v1022 = vadd.f32 %v994, %v996
    %v1023 = vadd.f32 %v1022, %v998
    %v1024 = vadd.f32 %v1023, %v1000
    %v1025 = vadd.f32 %v1024, %v1002
    %v1026 = vadd.f32 %v1025, %v1004
    %v1027 = vadd.f32 %v1026, %v1006
    %v1028 = vadd.f32 %v1027, %v1008
    %v1029 = vrot.slane %v1028, 4
    %v1030 = vadd.f32 %v1028, %v1029
    %v1031 = vrot.slane %v1030, 2
    %v1032 = vadd.f32 %v1030, %v1031
    %v1033 = vrot.slane %v1032, 1
    %v1034 = vadd.f32 %v1032, %v1033
    %v1035 = vmul.f32 %v1021, %v230
    %v1036 = vmul.f32 %v1034, %v230
    %v1037 = vadd.f32 %v1035, 1e-05
    %v1038 = vadd.f32 %v1036, 1e-05
    %v1039 = vrsqrt.pop %v1037
    %v1040 = vrsqrt.pop %v1038
    %v1041 = vmul.f32 %v977, %v1039
    %v1042 = vmul.f32 %v978, %v1040
    %v1043 = vmul.f32 %v979, %v1039
    %v1044 = vmul.f32 %v980, %v1040
    %v1045 = vmul.f32 %v981, %v1039
    %v1046 = vmul.f32 %v982, %v1040
    %v1047 = vmul.f32 %v983, %v1039
    %v1048 = vmul.f32 %v984, %v1040
    %v1049 = vmul.f32 %v985, %v1039
    %v1050 = vmul.f32 %v986, %v1040
    %v1051 = vmul.f32 %v987, %v1039
    %v1052 = vmul.f32 %v988, %v1040
    %v1053 = vmul.f32 %v989, %v1039
    %v1054 = vmul.f32 %v990, %v1040
    %v1055 = vmul.f32 %v991, %v1039
    %v1056 = vmul.f32 %v992, %v1040
    %v1058 = vlaneseq
    %v1059 = vshrl.u32 %v1058, 7
    %v1060 = vsub.s32 0, %v1059
    %v1061 = vrot.slane %v946, %v1060
    %v1062 = vlaneseq
    %v1063 = vshrl.u32 %v1062, 7
    %v1064 = vsub.s32 1, %v1063
    %v1065 = vrot.slane %v946, %v1064
    %v1068 = vmul.f32 %v1041, %v1061
    %v1069 = vmul.f32 %v1042, %v1065
    %v1070 = vmul.f32 %v1043, %v1061
    %v1071 = vmul.f32 %v1044, %v1065
    %v1072 = vmul.f32 %v1045, %v1061
    %v1073 = vmul.f32 %v1046, %v1065
    %v1074 = vmul.f32 %v1047, %v1061
    %v1075 = vmul.f32 %v1048, %v1065
    %v1076 = vmul.f32 %v1049, %v1061
    %v1077 = vmul.f32 %v1050, %v1065
    %v1078 = vmul.f32 %v1051, %v1061
    %v1079 = vmul.f32 %v1052, %v1065
    %v1080 = vmul.f32 %v1053, %v1061
    %v1081 = vmul.f32 %v1054, %v1065
    %v1082 = vmul.f32 %v1055, %v1061
    %v1083 = vmul.f32 %v1056, %v1065
    %v1085 = vlaneseq
    %v1086 = vshrl.u32 %v1085, 7
    %v1087 = vsub.s32 0, %v1086
    %v1088 = vrot.slane %v948, %v1087
    %v1089 = vlaneseq
    %v1090 = vshrl.u32 %v1089, 7
    %v1091 = vsub.s32 1, %v1090
    %v1092 = vrot.slane %v948, %v1091
    %v1095 = vadd.f32 %v1068, %v1088
    %v1096 = vadd.f32 %v1069, %v1092
    %v1097 = vadd.f32 %v1070, %v1088
    %v1098 = vadd.f32 %v1071, %v1092
    %v1099 = vadd.f32 %v1072, %v1088
    %v1100 = vadd.f32 %v1073, %v1092
    %v1101 = vadd.f32 %v1074, %v1088
    %v1102 = vadd.f32 %v1075, %v1092
    %v1103 = vadd.f32 %v1076, %v1088
    %v1104 = vadd.f32 %v1077, %v1092
    %v1105 = vadd.f32 %v1078, %v1088
    %v1106 = vadd.f32 %v1079, %v1092
    %v1107 = vadd.f32 %v1080, %v1088
    %v1108 = vadd.f32 %v1081, %v1092
    %v1109 = vadd.f32 %v1082, %v1088
    %v1110 = vadd.f32 %v1083, %v1092
    %v1111 = vtanh.pop %v1095
    %v1112 = vtanh.pop %v1096
    %v1113 = vtanh.pop %v1097
    %v1114 = vtanh.pop %v1098
    %v1115 = vtanh.pop %v1099
    %v1116 = vtanh.pop %v1100
    %v1117 = vtanh.pop %v1101
    %v1118 = vtanh.pop %v1102
    %v1119 = vtanh.pop %v1103
    %v1120 = vtanh.pop %v1104
    %v1121 = vtanh.pop %v1105
    %v1122 = vtanh.pop %v1106
    %v1123 = vtanh.pop %v1107
    %v1124 = vtanh.pop %v1108
    %v1125 = vtanh.pop %v1109
    %v1126 = vtanh.pop %v1110
    %v1127 = vadd.f32 %v1111, %v367
    %v1128 = vadd.f32 %v1112, %v368
    %v1129 = vadd.f32 %v1113, %v369
    %v1130 = vadd.f32 %v1114, %v370
    %v1131 = vadd.f32 %v1115, %v371
    %v1132 = vadd.f32 %v1116, %v372
    %v1133 = vadd.f32 %v1117, %v373
    %v1134 = vadd.f32 %v1118, %v374
    %v1135 = vadd.f32 %v1119, %v375
    %v1136 = vadd.f32 %v1120, %v376
    %v1137 = vadd.f32 %v1121, %v377
    %v1138 = vadd.f32 %v1122, %v378
    %v1139 = vadd.f32 %v1123, %v379
    %v1140 = vadd.f32 %v1124, %v380
    %v1141 = vadd.f32 %v1125, %v381
    %v1142 = vadd.f32 %v1126, %v382
    %s1143 = scalar_lea.vmem %s1, 18
    %v1144 = vld [vmem:[%s1143] ss:$8 sm:$0x3]
    %v1145 = vld [vmem:[#allocation7] sm:$0xff]
    %v1146 = vld [vmem:[#allocation7 + $0x8] sm:$0xff]
    %v1147 = vld [vmem:[#allocation7 + $0x10] sm:$0xff]
    %v1148 = vld [vmem:[#allocation7 + $0x18] sm:$0xff]
    %v1149 = vld [vmem:[#allocation7 + $0x20] sm:$0xff]
    %v1150 = vld [vmem:[#allocation7 + $0x28] sm:$0xff]
    %v1151 = vld [vmem:[#allocation7 + $0x30] sm:$0xff]
    %v1152 = vld [vmem:[#allocation7 + $0x38] sm:$0xff]
    %v1153 = vld [vmem:[#allocation7 + $0x40] sm:$0xff]
    %v1154 = vld [vmem:[#allocation7 + $0x48] sm:$0xff]
    %v1155 = vld [vmem:[#allocation7 + $0x50] sm:$0xff]
    %v1156 = vld [vmem:[#allocation7 + $0x58] sm:$0xff]
    %v1157 = vld [vmem:[#allocation7 + $0x60] sm:$0xff]
    %v1158 = vld [vmem:[#allocation7 + $0x68] sm:$0xff]
    %v1159 = vld [vmem:[#allocation7 + $0x70] sm:$0xff]
    %v1160 = vld [vmem:[#allocation7 + $0x78] sm:$0xff]
    %v1161 = vld [vmem:[#allocation7 + $0x80] sm:$0xff]
    %v1162 = vld [vmem:[#allocation7 + $0x88] sm:$0xff]
    %v1163 = vld [vmem:[#allocation7 + $0x90] sm:$0xff]
    %v1164 = vld [vmem:[#allocation7 + $0x98] sm:$0xff]
    %v1165 = vld [vmem:[#allocation7 + $0xa0] sm:$0xff]
    %v1166 = vld [vmem:[#allocation7 + $0xa8] sm:$0xff]
    %v1167 = vld [vmem:[#allocation7 + $0xb0] sm:$0xff]
    %v1168 = vld [vmem:[#allocation7 + $0xb8] sm:$0xff]
    %v1169 = vld [vmem:[#allocation7 + $0xc0] sm:$0xff]
    %v1170 = vld [vmem:[#allocation7 + $0xc8] sm:$0xff]
    %v1171 = vld [vmem:[#allocation7 + $0xd0] sm:$0xff]
    %v1172 = vld [vmem:[#allocation7 + $0xd8] sm:$0xff]
    %v1173 = vld [vmem:[#allocation7 + $0xe0] sm:$0xff]
    %v1174 = vld [vmem:[#allocation7 + $0xe8] sm:$0xff]
    %v1175 = vld [vmem:[#allocation7 + $0xf0] sm:$0xff]
    %v1176 = vld [vmem:[#allocation7 + $0xf8] sm:$0xff]
    %v1177 = vld [vmem:[#allocation7 + $0x100] sm:$0xff]
    %v1178 = vld [vmem:[#allocation7 + $0x108] sm:$0xff]
    %v1179 = vld [vmem:[#allocation7 + $0x110] sm:$0xff]
    %v1180 = vld [vmem:[#allocation7 + $0x118] sm:$0xff]
    %v1181 = vld [vmem:[#allocation7 + $0x120] sm:$0xff]
    %v1182 = vld [vmem:[#allocation7 + $0x128] sm:$0xff]
    %v1183 = vld [vmem:[#allocation7 + $0x130] sm:$0xff]
    %v1184 = vld [vmem:[#allocation7 + $0x138] sm:$0xff]
    %v1185 = vld [vmem:[#allocation7 + $0x140] sm:$0xff]
    %v1186 = vld [vmem:[#allocation7 + $0x148] sm:$0xff]
    %v1187 = vld [vmem:[#allocation7 + $0x150] sm:$0xff]
    %v1188 = vld [vmem:[#allocation7 + $0x158] sm:$0xff]
    %v1189 = vld [vmem:[#allocation7 + $0x160] sm:$0xff]
    %v1190 = vld [vmem:[#allocation7 + $0x168] sm:$0xff]
    %v1191 = vld [vmem:[#allocation7 + $0x170] sm:$0xff]
    %v1192 = vld [vmem:[#allocation7 + $0x178] sm:$0xff]
    %v1193 = vld [vmem:[#allocation7 + $0x180] sm:$0xff]
    %v1194 = vld [vmem:[#allocation7 + $0x188] sm:$0xff]
    %v1195 = vld [vmem:[#allocation7 + $0x190] sm:$0xff]
    %v1196 = vld [vmem:[#allocation7 + $0x198] sm:$0xff]
    %v1197 = vld [vmem:[#allocation7 + $0x1a0] sm:$0xff]
    %v1198 = vld [vmem:[#allocation7 + $0x1a8] sm:$0xff]
    %v1199 = vld [vmem:[#allocation7 + $0x1b0] sm:$0xff]
    %v1200 = vld [vmem:[#allocation7 + $0x1b8] sm:$0xff]
    %v1201 = vld [vmem:[#allocation7 + $0x1c0] sm:$0xff]
    %v1202 = vld [vmem:[#allocation7 + $0x1c8] sm:$0xff]
    %v1203 = vld [vmem:[#allocation7 + $0x1d0] sm:$0xff]
    %v1204 = vld [vmem:[#allocation7 + $0x1d8] sm:$0xff]
    %v1205 = vld [vmem:[#allocation7 + $0x1e0] sm:$0xff]
    %v1206 = vld [vmem:[#allocation7 + $0x1e8] sm:$0xff]
    %v1207 = vld [vmem:[#allocation7 + $0x1f0] sm:$0xff]
    %v1208 = vld [vmem:[#allocation7 + $0x1f8] sm:$0xff]
    %v1210 = vlaneseq
    %v1211 = vshrl.u32 %v1210, 7
    %v1212 = vsub.s32 0, %v1211
    %v1213 = vrot.slane %v1144, %v1212
    %v1214 = vlaneseq
    %v1215 = vshrl.u32 %v1214, 7
    %v1216 = vsub.s32 1, %v1215
    %v1217 = vrot.slane %v1144, %v1216
    %1220 = vmatprep.subr.mxu0 %v1146
    %1221 = vmatpush1.msra.mxu0 %v1145
    %1222 = vmatprep.subr.mxu0 %v1148
    %1223 = vmatpush1.msra.mxu0 %v1147
    %1224 = vmatprep.subr.mxu0 %v1150
    %1225 = vmatpush1.msra.mxu0 %v1149
    %1226 = vmatprep.subr.mxu0 %v1152
    %1227 = vmatpush1.msra.mxu0 %v1151
    %1228 = vmatprep.subr.mxu0 %v1154
    %1229 = vmatpush1.msra.mxu0 %v1153
    %1230 = vmatprep.subr.mxu0 %v1156
    %1231 = vmatpush1.msra.mxu0 %v1155
    %1232 = vmatprep.subr.mxu0 %v1158
    %1233 = vmatpush1.msra.mxu0 %v1157
    %1234 = vmatprep.subr.mxu0 %v1160
    %1235 = vmatpush1.msra.mxu0 %v1159
    %1236 = vmatprep.subr.mxu0 %v1162
    %1237 = vmatpush1.msra.mxu0 %v1161
    %1238 = vmatprep.subr.mxu0 %v1164
    %1239 = vmatpush1.msra.mxu0 %v1163
    %1240 = vmatprep.subr.mxu0 %v1166
    %1241 = vmatpush1.msra.mxu0 %v1165
    %1242 = vmatprep.subr.mxu0 %v1168
    %1243 = vmatpush1.msra.mxu0 %v1167
    %1244 = vmatprep.subr.mxu0 %v1170
    %1245 = vmatpush1.msra.mxu0 %v1169
    %1246 = vmatprep.subr.mxu0 %v1172
    %1247 = vmatpush1.msra.mxu0 %v1171
    %1248 = vmatprep.subr.mxu0 %v1174
    %1249 = vmatpush1.msra.mxu0 %v1173
    %1250 = vmatprep.subr.mxu0 %v1176
    %1251 = vmatpush1.msra.mxu0 %v1175
    %1252 = vmatprep.subr.mxu0 %v1178
    %1253 = vmatpush1.msra.mxu0 %v1177
    %1254 = vmatprep.subr.mxu0 %v1180
    %1255 = vmatpush1.msra.mxu0 %v1179
    %1256 = vmatprep.subr.mxu0 %v1182
    %1257 = vmatpush1.msra.mxu0 %v1181
    %1258 = vmatprep.subr.mxu0 %v1184
    %1259 = vmatpush1.msra.mxu0 %v1183
    %1260 = vmatprep.subr.mxu0 %v1186
    %1261 = vmatpush1.msra.mxu0 %v1185
    %1262 = vmatprep.subr.mxu0 %v1188
    %1263 = vmatpush1.msra.mxu0 %v1187
    %1264 = vmatprep.subr.mxu0 %v1190
    %1265 = vmatpush1.msra.mxu0 %v1189
    %1266 = vmatprep.subr.mxu0 %v1192
    %1267 = vmatpush1.msra.mxu0 %v1191
    %1268 = vmatprep.subr.mxu0 %v1194
    %1269 = vmatpush1.msra.mxu0 %v1193
    %1270 = vmatprep.subr.mxu0 %v1196
    %1271 = vmatpush1.msra.mxu0 %v1195
    %1272 = vmatprep.subr.mxu0 %v1198
    %1273 = vmatpush1.msra.mxu0 %v1197
    %1274 = vmatprep.subr.mxu0 %v1200
    %1275 = vmatpush1.msra.mxu0 %v1199
    %1276 = vmatprep.subr.mxu0 %v1202
    %1277 = vmatpush1.msra.mxu0 %v1201
    %1278 = vmatprep.subr.mxu0 %v1204
    %1279 = vmatpush1.msra.mxu0 %v1203
    %1280 = vmatprep.subr.mxu0 %v1206
    %1281 = vmatpush1.msra.mxu0 %v1205
    %1282 = vmatprep.subr.mxu0 %v1208
    %1283 = vmatpush1.msra.mxu0 %v1207
    %1284 = vmatprep.mubr.f32.mxu0 %v1128
    %1285 = vmatmul.mubr.f32.gmra.mrb[0].mxu0 %v1127
    %v1286 = vpop.f32.mrb[0].mxu0
    %v1287 = vadd.f32 %v1213, %v1286
    %v1288 = vpop.f32.mrb[0].mxu0
    %v1289 = vadd.f32 %v1217, %v1288
    %1290 = vmatprep.mubr.f32.mxu0 %v1130
    %1291 = vmatmul.mubr.f32.gmra.mrb[0].mxu0 %v1129
    %v1292 = vpop.f32.mrb[0].mxu0
    %v1293 = vadd.f32 %v1213, %v1292
    %v1294 = vpop.f32.mrb[0].mxu0
    %v1295 = vadd.f32 %v1217, %v1294
    %1296 = vmatprep.mubr.f32.mxu0 %v1132
    %1297 = vmatmul.mubr.f32.gmra.mrb[0].mxu0 %v1131
    %v1298 = vpop.f32.mrb[0].mxu0
    %v1299 = vadd.f32 %v1213, %v1298
    %v1300 = vpop.f32.mrb[0].mxu0
    %v1301 = vadd.f32 %v1217, %v1300
    %1302 = vmatprep.mubr.f32.mxu0 %v1134
    %1303 = vmatmul.mubr.f32.gmra.mrb[0].mxu0 %v1133
    %v1304 = vpop.f32.mrb[0].mxu0
    %v1305 = vadd.f32 %v1213, %v1304
    %v1306 = vpop.f32.mrb[0].mxu0
    %v1307 = vadd.f32 %v1217, %v1306
    %1308 = vmatprep.mubr.f32.mxu0 %v1136
    %1309 = vmatmul.mubr.f32.gmra.mrb[0].mxu0 %v1135
    %v1310 = vpop.f32.mrb[0].mxu0
    %v1311 = vadd.f32 %v1213, %v1310
    %v1312 = vpop.f32.mrb[0].mxu0
    %v1313 = vadd.f32 %v1217, %v1312
    %1314 = vmatprep.mubr.f32.mxu0 %v1138
    %1315 = vmatmul.mubr.f32.gmra.mrb[0].mxu0 %v1137
    %v1316 = vpop.f32.mrb[0].mxu0
    %v1317 = vadd.f32 %v1213, %v1316
    %v1318 = vpop.f32.mrb[0].mxu0
    %v1319 = vadd.f32 %v1217, %v1318
    %1320 = vmatprep.mubr.f32.mxu0 %v1140
    %1321 = vmatmul.mubr.f32.gmra.mrb[0].mxu0 %v1139
    %v1322 = vpop.f32.mrb[0].mxu0
    %v1323 = vadd.f32 %v1213, %v1322
    %v1324 = vpop.f32.mrb[0].mxu0
    %v1325 = vadd.f32 %v1217, %v1324
    %1326 = vmatprep.mubr.f32.mxu0 %v1142
    %1327 = vmatmul.mubr.f32.gmra.mrb[0].mxu0 %v1141
    %v1328 = vpop.f32.mrb[0].mxu0
    %v1329 = vadd.f32 %v1213, %v1328
    %v1330 = vpop.f32.mrb[0].mxu0
    %v1331 = vadd.f32 %v1217, %v1330
    %1332 = vdwg.mxu0
    %s1333 = scalar_lea.vmem %s1, 19
    %v1334 = vld [vmem:[%s1333] ss:$8 sm:$0x3]
    %s1335 = scalar_lea.vmem %s1, 20
    %v1336 = vld [vmem:[%s1335] ss:$8 sm:$0x3]
    %v1337 = vadd.f32 %v1287, %v1293
    %v1338 = vadd.f32 %v1337, %v1299
    %v1339 = vadd.f32 %v1338, %v1305
    %v1340 = vadd.f32 %v1339, %v1311
    %v1341 = vadd.f32 %v1340, %v1317
    %v1342 = vadd.f32 %v1341, %v1323
    %v1343 = vadd.f32 %v1342, %v1329
    %v1344 = vrot.slane %v1343, 4
    %v1345 = vadd.f32 %v1343, %v1344
    %v1346 = vrot.slane %v1345, 2
    %v1347 = vadd.f32 %v1345, %v1346
    %v1348 = vrot.slane %v1347, 1
    %v1349 = vadd.f32 %v1347, %v1348
    %v1350 = vadd.f32 %v1289, %v1295
    %v1351 = vadd.f32 %v1350, %v1301
    %v1352 = vadd.f32 %v1351, %v1307
    %v1353 = vadd.f32 %v1352, %v1313
    %v1354 = vadd.f32 %v1353, %v1319
    %v1355 = vadd.f32 %v1354, %v1325
    %v1356 = vadd.f32 %v1355, %v1331
    %v1357 = vrot.slane %v1356, 4
    %v1358 = vadd.f32 %v1356, %v1357
    %v1359 = vrot.slane %v1358, 2
    %v1360 = vadd.f32 %v1358, %v1359
    %v1361 = vrot.slane %v1360, 1
    %v1362 = vadd.f32 %v1360, %v1361
    %v1363 = vmul.f32 %v1349, %v230
    %v1364 = vmul.f32 %v1362, %v230
    %v1365 = vsub.f32 %v1287, %v1363
    %v1366 = vsub.f32 %v1289, %v1364
    %v1367 = vsub.f32 %v1293, %v1363
    %v1368 = vsub.f32 %v1295, %v1364
    %v1369 = vsub.f32 %v1299, %v1363
    %v1370 = vsub.f32 %v1301, %v1364
    %v1371 = vsub.f32 %v1305, %v1363
    %v1372 = vsub.f32 %v1307, %v1364
    %v1373 = vsub.f32 %v1311, %v1363
    %v1374 = vsub.f32 %v1313, %v1364
    %v1375 = vsub.f32 %v1317, %v1363
    %v1376 = vsub.f32 %v1319, %v1364
    %v1377 = vsub.f32 %v1323, %v1363
    %v1378 = vsub.f32 %v1325, %v1364
    %v1379 = vsub.f32 %v1329, %v1363
    %v1380 = vsub.f32 %v1331, %v1364
    %v1381 = vmul.f32 %v1365, %v1365
    %v1382 = vmul.f32 %v1366, %v1366
    %v1383 = vmul.f32 %v1367, %v1367
    %v1384 = vmul.f32 %v1368, %v1368
    %v1385 = vmul.f32 %v1369, %v1369
    %v1386 = vmul.f32 %v1370, %v1370
    %v1387 = vmul.f32 %v1371, %v1371
    %v1388 = vmul.f32 %v1372, %v1372
    %v1389 = vmul.f32 %v1373, %v1373
    %v1390 = vmul.f32 %v1374, %v1374
    %v1391 = vmul.f32 %v1375, %v1375
    %v1392 = vmul.f32 %v1376, %v1376
    %v1393 = vmul.f32 %v1377, %v1377
    %v1394 = vmul.f32 %v1378, %v1378
    %v1395 = vmul.f32 %v1379, %v1379
    %v1396 = vmul.f32 %v1380, %v1380
    %v1397 = vadd.f32 %v1381, %v1383
    %v1398 = vadd.f32 %v1397, %v1385
    %v1399 = vadd.f32 %v1398, %v1387
    %v1400 = vadd.f32 %v1399, %v1389
    %v1401 = vadd.f32 %v1400, %v1391
    %v1402 = vadd.f32 %v1401, %v1393
    %v1403 = vadd.f32 %v1402, %v1395
    %v1404 = vrot.slane %v1403, 4
    %v1405 = vadd.f32 %v1403, %v1404
    %v1406 = vrot.slane %v1405, 2
    %v1407 = vadd.f32 %v1405, %v1406
    %v1408 = vrot.slane %v1407, 1
    %v1409 = vadd.f32 %v1407, %v1408
    %v1410 = vadd.f32 %v1382, %v1384
    %v1411 = vadd.f32 %v1410, %v1386
    %v1412 = vadd.f32 %v1411, %v1388
    %v1413 = vadd.f32 %v1412, %v1390
    %v1414 = vadd.f32 %v1413, %v1392
    %v1415 = vadd.f32 %v1414, %v1394
    %v1416 = vadd.f32 %v1415, %v1396
    %v1417 = vrot.slane %v1416, 4
    %v1418 = vadd.f32 %v1416, %v1417
    %v1419 = vrot.slane %v1418, 2
    %v1420 = vadd.f32 %v1418, %v1419
    %v1421 = vrot.slane %v1420, 1
    %v1422 = vadd.f32 %v1420, %v1421
    %v1423 = vmul.f32 %v1409, %v230
    %v1424 = vmul.f32 %v1422, %v230
    %v1425 = vadd.f32 %v1423, 1e-05
    %v1426 = vadd.f32 %v1424, 1e-05
    %v1427 = vrsqrt.pop %v1425
    %v1428 = vrsqrt.pop %v1426
    %v1429 = vmul.f32 %v1365, %v1427
    %v1430 = vmul.f32 %v1366, %v1428
    %v1431 = vmul.f32 %v1367, %v1427
    %v1432 = vmul.f32 %v1368, %v1428
    %v1433 = vmul.f32 %v1369, %v1427
    %v1434 = vmul.f32 %v1370, %v1428
    %v1435 = vmul.f32 %v1371, %v1427
    %v1436 = vmul.f32 %v1372, %v1428
    %v1437 = vmul.f32 %v1373, %v1427
    %v1438 = vmul.f32 %v1374, %v1428
    %v1439 = vmul.f32 %v1375, %v1427
    %v1440 = vmul.f32 %v1376, %v1428
    %v1441 = vmul.f32 %v1377, %v1427
    %v1442 = vmul.f32 %v1378, %v1428
    %v1443 = vmul.f32 %v1379, %v1427
    %v1444 = vmul.f32 %v1380, %v1428
    %v1446 = vlaneseq
    %v1447 = vshrl.u32 %v1446, 7
    %v1448 = vsub.s32 0, %v1447
    %v1449 = vrot.slane %v1334, %v1448
    %v1450 = vlaneseq
    %v1451 = vshrl.u32 %v1450, 7
    %v1452 = vsub.s32 1, %v1451
    %v1453 = vrot.slane %v1334, %v1452
    %v1456 = vmul.f32 %v1429, %v1449
    %v1457 = vmul.f32 %v1430, %v1453
    %v1458 = vmul.f32 %v1431, %v1449
    %v1459 = vmul.f32 %v1432, %v1453
    %v1460 = vmul.f32 %v1433, %v1449
    %v1461 = vmul.f32 %v1434, %v1453
    %v1462 = vmul.f32 %v1435, %v1449
    %v1463 = vmul.f32 %v1436, %v1453
    %v1464 = vmul.f32 %v1437, %v1449
    %v1465 = vmul.f32 %v1438, %v1453
    %v1466 = vmul.f32 %v1439, %v1449
    %v1467 = vmul.f32 %v1440, %v1453
    %v1468 = vmul.f32 %v1441, %v1449
    %v1469 = vmul.f32 %v1442, %v1453
    %v1470 = vmul.f32 %v1443, %v1449
    %v1471 = vmul.f32 %v1444, %v1453
    %v1473 = vlaneseq
    %v1474 = vshrl.u32 %v1473, 7
    %v1475 = vsub.s32 0, %v1474
    %v1476 = vrot.slane %v1336, %v1475
    %v1477 = vlaneseq
    %v1478 = vshrl.u32 %v1477, 7
    %v1479 = vsub.s32 1, %v1478
    %v1480 = vrot.slane %v1336, %v1479
    %v1483 = vadd.f32 %v1456, %v1476
    %v1484 = vadd.f32 %v1457, %v1480
    %v1485 = vadd.f32 %v1458, %v1476
    %v1486 = vadd.f32 %v1459, %v1480
    %v1487 = vadd.f32 %v1460, %v1476
    %v1488 = vadd.f32 %v1461, %v1480
    %v1489 = vadd.f32 %v1462, %v1476
    %v1490 = vadd.f32 %v1463, %v1480
    %v1491 = vadd.f32 %v1464, %v1476
    %v1492 = vadd.f32 %v1465, %v1480
    %v1493 = vadd.f32 %v1466, %v1476
    %v1494 = vadd.f32 %v1467, %v1480
    %v1495 = vadd.f32 %v1468, %v1476
    %v1496 = vadd.f32 %v1469, %v1480
    %v1497 = vadd.f32 %v1470, %v1476
    %v1498 = vadd.f32 %v1471, %v1480
    %v1499 = vtanh.pop %v1483
    %v1500 = vtanh.pop %v1484
    %v1501 = vtanh.pop %v1485
    %v1502 = vtanh.pop %v1486
    %v1503 = vtanh.pop %v1487
    %v1504 = vtanh.pop %v1488
    %v1505 = vtanh.pop %v1489
    %v1506 = vtanh.pop %v1490
    %v1507 = vtanh.pop %v1491
    %v1508 = vtanh.pop %v1492
    %v1509 = vtanh.pop %v1493
    %v1510 = vtanh.pop %v1494
    %v1511 = vtanh.pop %v1495
    %v1512 = vtanh.pop %v1496
    %v1513 = vtanh.pop %v1497
    %v1514 = vtanh.pop %v1498
    %v1515 = vld [vmem:[%s1 + $0x15] ss:$0 sm:$0xff]
    %v1516 = vld [vmem:[#allocation8] sm:$0xff]
    %v1517 = vld [vmem:[#allocation8 + $0x8] sm:$0xff]
    %v1518 = vld [vmem:[#allocation8 + $0x10] sm:$0xff]
    %v1519 = vld [vmem:[#allocation8 + $0x18] sm:$0xff]
    %v1520 = vld [vmem:[#allocation8 + $0x20] sm:$0xff]
    %v1521 = vld [vmem:[#allocation8 + $0x28] sm:$0xff]
    %v1522 = vld [vmem:[#allocation8 + $0x30] sm:$0xff]
    %v1523 = vld [vmem:[#allocation8 + $0x38] sm:$0xff]
    %v1524 = vld [vmem:[#allocation8 + $0x40] sm:$0xff]
    %v1525 = vld [vmem:[#allocation8 + $0x48] sm:$0xff]
    %v1526 = vld [vmem:[#allocation8 + $0x50] sm:$0xff]
    %v1527 = vld [vmem:[#allocation8 + $0x58] sm:$0xff]
    %v1528 = vld [vmem:[#allocation8 + $0x60] sm:$0xff]
    %v1529 = vld [vmem:[#allocation8 + $0x68] sm:$0xff]
    %v1530 = vld [vmem:[#allocation8 + $0x70] sm:$0xff]
    %v1531 = vld [vmem:[#allocation8 + $0x78] sm:$0xff]
    %v1532 = vld [vmem:[#allocation8 + $0x80] sm:$0xff]
    %v1533 = vld [vmem:[#allocation8 + $0x88] sm:$0xff]
    %v1534 = vld [vmem:[#allocation8 + $0x90] sm:$0xff]
    %v1535 = vld [vmem:[#allocation8 + $0x98] sm:$0xff]
    %v1536 = vld [vmem:[#allocation8 + $0xa0] sm:$0xff]
    %v1537 = vld [vmem:[#allocation8 + $0xa8] sm:$0xff]
    %v1538 = vld [vmem:[#allocation8 + $0xb0] sm:$0xff]
    %v1539 = vld [vmem:[#allocation8 + $0xb8] sm:$0xff]
    %v1540 = vld [vmem:[#allocation8 + $0xc0] sm:$0xff]
    %v1541 = vld [vmem:[#allocation8 + $0xc8] sm:$0xff]
    %v1542 = vld [vmem:[#allocation8 + $0xd0] sm:$0xff]
    %v1543 = vld [vmem:[#allocation8 + $0xd8] sm:$0xff]
    %v1544 = vld [vmem:[#allocation8 + $0xe0] sm:$0xff]
    %v1545 = vld [vmem:[#allocation8 + $0xe8] sm:$0xff]
    %v1546 = vld [vmem:[#allocation8 + $0xf0] sm:$0xff]
    %v1547 = vld [vmem:[#allocation8 + $0xf8] sm:$0xff]
    %1548 = vmatprep.subr.mxu0 0.0
    %1549 = vmatpush1.msra.mxu0 %v1516
    %1550 = vmatprep.subr.mxu0 0.0
    %1551 = vmatpush1.msra.mxu0 %v1517
    %1552 = vmatprep.subr.mxu0 0.0
    %1553 = vmatpush1.msra.mxu0 %v1518
    %1554 = vmatprep.subr.mxu0 0.0
    %1555 = vmatpush1.msra.mxu0 %v1519
    %1556 = vmatprep.subr.mxu0 0.0
    %1557 = vmatpush1.msra.mxu0 %v1520
    %1558 = vmatprep.subr.mxu0 0.0
    %1559 = vmatpush1.msra.mxu0 %v1521
    %1560 = vmatprep.subr.mxu0 0.0
    %1561 = vmatpush1.msra.mxu0 %v1522
    %1562 = vmatprep.subr.mxu0 0.0
    %1563 = vmatpush1.msra.mxu0 %v1523
    %1564 = vmatprep.subr.mxu0 0.0
    %1565 = vmatpush1.msra.mxu0 %v1524
    %1566 = vmatprep.subr.mxu0 0.0
    %1567 = vmatpush1.msra.mxu0 %v1525
    %1568 = vmatprep.subr.mxu0 0.0
    %1569 = vmatpush1.msra.mxu0 %v1526
    %1570 = vmatprep.subr.mxu0 0.0
    %1571 = vmatpush1.msra.mxu0 %v1527
    %1572 = vmatprep.subr.mxu0 0.0
    %1573 = vmatpush1.msra.mxu0 %v1528
    %1574 = vmatprep.subr.mxu0 0.0
    %1575 = vmatpush1.msra.mxu0 %v1529
    %1576 = vmatprep.subr.mxu0 0.0
    %1577 = vmatpush1.msra.mxu0 %v1530
    %1578 = vmatprep.subr.mxu0 0.0
    %1579 = vmatpush1.msra.mxu0 %v1531
    %1580 = vmatprep.subr.mxu0 0.0
    %1581 = vmatpush1.msra.mxu0 %v1532
    %1582 = vmatprep.subr.mxu0 0.0
    %1583 = vmatpush1.msra.mxu0 %v1533
    %1584 = vmatprep.subr.mxu0 0.0
    %1585 = vmatpush1.msra.mxu0 %v1534
    %1586 = vmatprep.subr.mxu0 0.0
    %1587 = vmatpush1.msra.mxu0 %v1535
    %1588 = vmatprep.subr.mxu0 0.0
    %1589 = vmatpush1.msra.mxu0 %v1536
    %1590 = vmatprep.subr.mxu0 0.0
    %1591 = vmatpush1.msra.mxu0 %v1537
    %1592 = vmatprep.subr.mxu0 0.0
    %1593 = vmatpush1.msra.mxu0 %v1538
    %1594 = vmatprep.subr.mxu0 0.0
    %1595 = vmatpush1.msra.mxu0 %v1539
    %1596 = vmatprep.subr.mxu0 0.0
    %1597 = vmatpush1.msra.mxu0 %v1540
    %1598 = vmatprep.subr.mxu0 0.0
    %1599 = vmatpush1.msra.mxu0 %v1541
    %1600 = vmatprep.subr.mxu0 0.0
    %1601 = vmatpush1.msra.mxu0 %v1542
    %1602 = vmatprep.subr.mxu0 0.0
    %1603 = vmatpush1.msra.mxu0 %v1543
    %1604 = vmatprep.subr.mxu0 0.0
    %1605 = vmatpush1.msra.mxu0 %v1544
    %1606 = vmatprep.subr.mxu0 0.0
    %1607 = vmatpush1.msra.mxu0 %v1545
    %1608 = vmatprep.subr.mxu0 0.0
    %1609 = vmatpush1.msra.mxu0 %v1546
    %1610 = vmatprep.subr.mxu0 0.0
    %1611 = vmatpush1.msra.mxu0 %v1547
    %1612 = vmatprep.mubr.f32.mxu0 %v1500
    %1613 = vmatmul.mubr.f32.gmra.mrb[0].mxu0 %v1499
    %v1614 = vpop.f32.mrb[0].mxu0
    %v1615 = vadd.f32 %v1515, %v1614
    %v1616 = vpop.f32.mrb[0].mxu0
    %1617 = vmatprep.mubr.f32.mxu0 %v1502
    %1618 = vmatmul.mubr.f32.gmra.mrb[0].mxu0 %v1501
    %v1619 = vpop.f32.mrb[0].mxu0
    %v1620 = vadd.f32 %v1515, %v1619
    %v1621 = vpop.f32.mrb[0].mxu0
    %1622 = vmatprep.mubr.f32.mxu0 %v1504
    %1623 = vmatmul.mubr.f32.gmra.mrb[0].mxu0 %v1503
    %v1624 = vpop.f32.mrb[0].mxu0
    %v1625 = vadd.f32 %v1515, %v1624
    %v1626 = vpop.f32.mrb[0].mxu0
    %1627 = vmatprep.mubr.f32.mxu0 %v1506
    %1628 = vmatmul.mubr.f32.gmra.mrb[0].mxu0 %v1505
    %v1629 = vpop.f32.mrb[0].mxu0
    %v1630 = vadd.f32 %v1515, %v1629
    %v1631 = vpop.f32.mrb[0].mxu0
    %1632 = vmatprep.mubr.f32.mxu0 %v1508
    %1633 = vmatmul.mubr.f32.gmra.mrb[0].mxu0 %v1507
    %v1634 = vpop.f32.mrb[0].mxu0
    %v1635 = vadd.f32 %v1515, %v1634
    %v1636 = vpop.f32.mrb[0].mxu0
    %1637 = vmatprep.mubr.f32.mxu0 %v1510
    %1638 = vmatmul.mubr.f32.gmra.mrb[0].mxu0 %v1509
    %v1639 = vpop.f32.mrb[0].mxu0
    %v1640 = vadd.f32 %v1515, %v1639
    %v1641 = vpop.f32.mrb[0].mxu0
    %1642 = vmatprep.mubr.f32.mxu0 %v1512
    %1643 = vmatmul.mubr.f32.gmra.mrb[0].mxu0 %v1511
    %v1644 = vpop.f32.mrb[0].mxu0
    %v1645 = vadd.f32 %v1515, %v1644
    %v1646 = vpop.f32.mrb[0].mxu0
    %1647 = vmatprep.mubr.f32.mxu0 %v1514
    %1648 = vmatmul.mubr.f32.gmra.mrb[0].mxu0 %v1513
    %v1649 = vpop.f32.mrb[0].mxu0
    %v1650 = vadd.f32 %v1515, %v1649
    %v1651 = vpop.f32.mrb[0].mxu0
    %1652 = vdwg.mxu0
    %v1653 = vld [vmem:[%s1 + $0x16] ss:$0 sm:$0xff]
    %v1654 = vld [vmem:[%s1 + $0x17] ss:$0 sm:$0xff]
    %v1655 = vadd.f32 %v1615, %v1620
    %v1656 = vadd.f32 %v1655, %v1625
    %v1657 = vadd.f32 %v1656, %v1630
    %v1658 = vadd.f32 %v1657, %v1635
    %v1659 = vadd.f32 %v1658, %v1640
    %v1660 = vadd.f32 %v1659, %v1645
    %v1661 = vadd.f32 %v1660, %v1650
    %v1662 = vrot.slane %v1661, 4
    %v1663 = vadd.f32 %v1661, %v1662
    %v1664 = vrot.slane %v1663, 2
    %v1665 = vadd.f32 %v1663, %v1664
    %v1666 = vrot.slane %v1665, 1
    %v1667 = vadd.f32 %v1665, %v1666
    %v1668 = vmul.f32 %v1667, %v230
    %v1669 = vsub.f32 %v1615, %v1668
    %v1670 = vsub.f32 %v1620, %v1668
    %v1671 = vsub.f32 %v1625, %v1668
    %v1672 = vsub.f32 %v1630, %v1668
    %v1673 = vsub.f32 %v1635, %v1668
    %v1674 = vsub.f32 %v1640, %v1668
    %v1675 = vsub.f32 %v1645, %v1668
    %v1676 = vsub.f32 %v1650, %v1668
    %v1677 = vmul.f32 %v1669, %v1669
    %v1678 = vmul.f32 %v1670, %v1670
    %v1679 = vmul.f32 %v1671, %v1671
    %v1680 = vmul.f32 %v1672, %v1672
    %v1681 = vmul.f32 %v1673, %v1673
    %v1682 = vmul.f32 %v1674, %v1674
    %v1683 = vmul.f32 %v1675, %v1675
    %v1684 = vmul.f32 %v1676, %v1676
    %v1685 = vadd.f32 %v1677, %v1678
    %v1686 = vadd.f32 %v1685, %v1679
    %v1687 = vadd.f32 %v1686, %v1680
    %v1688 = vadd.f32 %v1687, %v1681
    %v1689 = vadd.f32 %v1688, %v1682
    %v1690 = vadd.f32 %v1689, %v1683
    %v1691 = vadd.f32 %v1690, %v1684
    %v1692 = vrot.slane %v1691, 4
    %v1693 = vadd.f32 %v1691, %v1692
    %v1694 = vrot.slane %v1693, 2
    %v1695 = vadd.f32 %v1693, %v1694
    %v1696 = vrot.slane %v1695, 1
    %v1697 = vadd.f32 %v1695, %v1696
    %v1698 = vmul.f32 %v1697, %v230
    %v1699 = vadd.f32 %v1698, 1e-05
    %v1700 = vrsqrt.pop %v1699
    %v1701 = vmul.f32 %v1669, %v1700
    %v1702 = vmul.f32 %v1670, %v1700
    %v1703 = vmul.f32 %v1671, %v1700
    %v1704 = vmul.f32 %v1672, %v1700
    %v1705 = vmul.f32 %v1673, %v1700
    %v1706 = vmul.f32 %v1674, %v1700
    %v1707 = vmul.f32 %v1675, %v1700
    %v1708 = vmul.f32 %v1676, %v1700
    %v1709 = vmul.f32 %v1701, %v1653
    %v1710 = vmul.f32 %v1702, %v1653
    %v1711 = vmul.f32 %v1703, %v1653
    %v1712 = vmul.f32 %v1704, %v1653
    %v1713 = vmul.f32 %v1705, %v1653
    %v1714 = vmul.f32 %v1706, %v1653
    %v1715 = vmul.f32 %v1707, %v1653
    %v1716 = vmul.f32 %v1708, %v1653
    %v1717 = vadd.f32 %v1709, %v1654
    %v1718 = vadd.f32 %v1710, %v1654
    %v1719 = vadd.f32 %v1711, %v1654
    %v1720 = vadd.f32 %v1712, %v1654
    %v1721 = vadd.f32 %v1713, %v1654
    %v1722 = vadd.f32 %v1714, %v1654
    %v1723 = vadd.f32 %v1715, %v1654
    %v1724 = vadd.f32 %v1716, %v1654
    %v1725 = vtanh.pop %v1717
    %v1726 = vtanh.pop %v1718
    %v1727 = vtanh.pop %v1719
    %v1728 = vtanh.pop %v1720
    %v1729 = vtanh.pop %v1721
    %v1730 = vtanh.pop %v1722
    %v1731 = vtanh.pop %v1723
    %v1732 = vtanh.pop %v1724
    %v1733 = vld [vmem:[%s1 + $0x20] ss:$0 sm:$0xff]
    %v1734 = vld [vmem:[#allocation10] sm:$0xff]
    %v1735 = vld [vmem:[#allocation10 + $0x8] sm:$0xff]
    %v1736 = vld [vmem:[#allocation10 + $0x10] sm:$0xff]
    %v1737 = vld [vmem:[#allocation10 + $0x18] sm:$0xff]
    %v1738 = vld [vmem:[#allocation10 + $0x20] sm:$0xff]
    %v1739 = vld [vmem:[#allocation10 + $0x28] sm:$0xff]
    %v1740 = vld [vmem:[#allocation10 + $0x30] sm:$0xff]
    %v1741 = vld [vmem:[#allocation10 + $0x38] sm:$0xff]
    %v1742 = vld [vmem:[#allocation10 + $0x40] sm:$0xff]
    %v1743 = vld [vmem:[#allocation10 + $0x48] sm:$0xff]
    %v1744 = vld [vmem:[#allocation10 + $0x50] sm:$0xff]
    %v1745 = vld [vmem:[#allocation10 + $0x58] sm:$0xff]
    %v1746 = vld [vmem:[#allocation10 + $0x60] sm:$0xff]
    %v1747 = vld [vmem:[#allocation10 + $0x68] sm:$0xff]
    %v1748 = vld [vmem:[#allocation10 + $0x70] sm:$0xff]
    %v1749 = vld [vmem:[#allocation10 + $0x78] sm:$0xff]
    %1750 = vmatprep.subr.mxu0 0.0
    %1751 = vmatpush1.msra.mxu0 %v1734
    %1752 = vmatprep.subr.mxu0 0.0
    %1753 = vmatpush1.msra.mxu0 %v1735
    %1754 = vmatprep.subr.mxu0 0.0
    %1755 = vmatpush1.msra.mxu0 %v1736
    %1756 = vmatprep.subr.mxu0 0.0
    %1757 = vmatpush1.msra.mxu0 %v1737
    %1758 = vmatprep.subr.mxu0 0.0
    %1759 = vmatpush1.msra.mxu0 %v1738
    %1760 = vmatprep.subr.mxu0 0.0
    %1761 = vmatpush1.msra.mxu0 %v1739
    %1762 = vmatprep.subr.mxu0 0.0
    %1763 = vmatpush1.msra.mxu0 %v1740
    %1764 = vmatprep.subr.mxu0 0.0
    %1765 = vmatpush1.msra.mxu0 %v1741
    %1766 = vmatprep.subr.mxu0 0.0
    %1767 = vmatpush1.msra.mxu0 %v1742
    %1768 = vmatprep.subr.mxu0 0.0
    %1769 = vmatpush1.msra.mxu0 %v1743
    %1770 = vmatprep.subr.mxu0 0.0
    %1771 = vmatpush1.msra.mxu0 %v1744
    %1772 = vmatprep.subr.mxu0 0.0
    %1773 = vmatpush1.msra.mxu0 %v1745
    %1774 = vmatprep.subr.mxu0 0.0
    %1775 = vmatpush1.msra.mxu0 %v1746
    %1776 = vmatprep.subr.mxu0 0.0
    %1777 = vmatpush1.msra.mxu0 %v1747
    %1778 = vmatprep.subr.mxu0 0.0
    %1779 = vmatpush1.msra.mxu0 %v1748
    %1780 = vmatprep.subr.mxu0 0.0
    %1781 = vmatpush1.msra.mxu0 %v1749
    %1782 = vmatprep.subr.mxu0 0.0
    %1783 = vmatpush1.msra.mxu0 0.0
    %1784 = vmatprep.subr.mxu0 0.0
    %1785 = vmatpush1.msra.mxu0 0.0
    %1786 = vmatprep.subr.mxu0 0.0
    %1787 = vmatpush1.msra.mxu0 0.0
    %1788 = vmatprep.subr.mxu0 0.0
    %1789 = vmatpush1.msra.mxu0 0.0
    %1790 = vmatprep.subr.mxu0 0.0
    %1791 = vmatpush1.msra.mxu0 0.0
    %1792 = vmatprep.subr.mxu0 0.0
    %1793 = vmatpush1.msra.mxu0 0.0
    %1794 = vmatprep.subr.mxu0 0.0
    %1795 = vmatpush1.msra.mxu0 0.0
    %1796 = vmatprep.subr.mxu0 0.0
    %1797 = vmatpush1.msra.mxu0 0.0
    %1798 = vmatprep.subr.mxu0 0.0
    %1799 = vmatpush1.msra.mxu0 0.0
    %1800 = vmatprep.subr.mxu0 0.0
    %1801 = vmatpush1.msra.mxu0 0.0
    %1802 = vmatprep.subr.mxu0 0.0
    %1803 = vmatpush1.msra.mxu0 0.0
    %1804 = vmatprep.subr.mxu0 0.0
    %1805 = vmatpush1.msra.mxu0 0.0
    %1806 = vmatprep.subr.mxu0 0.0
    %1807 = vmatpush1.msra.mxu0 0.0
    %1808 = vmatprep.subr.mxu0 0.0
    %1809 = vmatpush1.msra.mxu0 0.0
    %1810 = vmatprep.subr.mxu0 0.0
    %1811 = vmatpush1.msra.mxu0 0.0
    %1812 = vmatprep.subr.mxu0 0.0
    %1813 = vmatpush1.msra.mxu0 0.0
    %1814 = vmatprep.mubr.f32.mxu0 0.0
    %1815 = vmatmul.mubr.f32.gmra.mrb[0].mxu0 %v1725
    %v1816 = vpop.f32.mrb[0].mxu0
    %v1817 = vadd.f32 %v1733, %v1816
    %v1818 = vpop.f32.mrb[0].mxu0
    %1819 = vmatprep.mubr.f32.mxu0 0.0
    %1820 = vmatmul.mubr.f32.gmra.mrb[0].mxu0 %v1726
    %v1821 = vpop.f32.mrb[0].mxu0
    %v1822 = vadd.f32 %v1733, %v1821
    %v1823 = vpop.f32.mrb[0].mxu0
    %1824 = vmatprep.mubr.f32.mxu0 0.0
    %1825 = vmatmul.mubr.f32.gmra.mrb[0].mxu0 %v1727
    %v1826 = vpop.f32.mrb[0].mxu0
    %v1827 = vadd.f32 %v1733, %v1826
    %v1828 = vpop.f32.mrb[0].mxu0
    %1829 = vmatprep.mubr.f32.mxu0 0.0
    %1830 = vmatmul.mubr.f32.gmra.mrb[0].mxu0 %v1728
    %v1831 = vpop.f32.mrb[0].mxu0
    %v1832 = vadd.f32 %v1733, %v1831
    %v1833 = vpop.f32.mrb[0].mxu0
    %1834 = vmatprep.mubr.f32.mxu0 0.0
    %1835 = vmatmul.mubr.f32.gmra.mrb[0].mxu0 %v1729
    %v1836 = vpop.f32.mrb[0].mxu0
    %v1837 = vadd.f32 %v1733, %v1836
    %v1838 = vpop.f32.mrb[0].mxu0
    %1839 = vmatprep.mubr.f32.mxu0 0.0
    %1840 = vmatmul.mubr.f32.gmra.mrb[0].mxu0 %v1730
    %v1841 = vpop.f32.mrb[0].mxu0
    %v1842 = vadd.f32 %v1733, %v1841
    %v1843 = vpop.f32.mrb[0].mxu0
    %1844 = vmatprep.mubr.f32.mxu0 0.0
    %1845 = vmatmul.mubr.f32.gmra.mrb[0].mxu0 %v1731
    %v1846 = vpop.f32.mrb[0].mxu0
    %v1847 = vadd.f32 %v1733, %v1846
    %v1848 = vpop.f32.mrb[0].mxu0
    %1849 = vmatprep.mubr.f32.mxu0 0.0
    %1850 = vmatmul.mubr.f32.gmra.mrb[0].mxu0 %v1732
    %v1851 = vpop.f32.mrb[0].mxu0
    %v1852 = vadd.f32 %v1733, %v1851
    %v1853 = vpop.f32.mrb[0].mxu0
    %1854 = vdwg.mxu0
    %v1855 = vtanh.pop %v1817
    %v1856 = vtanh.pop %v1822
    %v1857 = vtanh.pop %v1827
    %v1858 = vtanh.pop %v1832
    %v1859 = vtanh.pop %v1837
    %v1860 = vtanh.pop %v1842
    %v1861 = vtanh.pop %v1847
    %v1862 = vtanh.pop %v1852
    %v1863 = vld [vmem:[%s1 + $0x21] ss:$0 sm:$0xff]
    %v1864 = vmul.f32 %v1855, %v1863
    %v1865 = vmul.f32 %v1856, %v1863
    %v1866 = vmul.f32 %v1857, %v1863
    %v1867 = vmul.f32 %v1858, %v1863
    %v1868 = vmul.f32 %v1859, %v1863
    %v1869 = vmul.f32 %v1860, %v1863
    %v1870 = vmul.f32 %v1861, %v1863
    %v1871 = vmul.f32 %v1862, %v1863
    %v1872 = vld [vmem:[%s1 + $0x22] ss:$0 sm:$0xff]
    %v1873 = vadd.f32 %v1864, %v1872
    %v1874 = vadd.f32 %v1865, %v1872
    %v1875 = vadd.f32 %v1866, %v1872
    %v1876 = vadd.f32 %v1867, %v1872
    %v1877 = vadd.f32 %v1868, %v1872
    %v1878 = vadd.f32 %v1869, %v1872
    %v1879 = vadd.f32 %v1870, %v1872
    %v1880 = vadd.f32 %v1871, %v1872
    %1881 = vst [vmem:[#allocation11] sm:$0xff] %v1873
    %1882 = vst [vmem:[#allocation11 + $0x8] sm:$0xff] %v1874
    %1883 = vst [vmem:[#allocation11 + $0x10] sm:$0xff] %v1875
    %1884 = vst [vmem:[#allocation11 + $0x18] sm:$0xff] %v1876
    %1885 = vst [vmem:[#allocation11 + $0x20] sm:$0xff] %v1877
    %1886 = vst [vmem:[#allocation11 + $0x28] sm:$0xff] %v1878
    %1887 = vst [vmem:[#allocation11 + $0x30] sm:$0xff] %v1879
    %1888 = vst [vmem:[#allocation11 + $0x38] sm:$0xff] %v1880
    // Predicated region
    $region50: #{tpu_custom_call.1} parent=1 // pred_check
      _
    $region51: #{tpu_custom_call.1} parent=1 // pred_check_branch
      %1890 = sbr.rel (0) target = $region53
    $region52: #{tpu_custom_call.1} parent=1 // pred_region
      %s1892 = ssub.s32 1024, 1024
      %1893 = vsyncadd [#allocation4], %s1892
      %s1894 = sshll.u32 [#allocation11], 4
      %s1895 = int_to_ptr.vmem [resolvable:$true] %s1894
      %1900 = dma.vmem_to_hbm [thread:$0]  %s1895, 1024, %s7, [#allocation4], 128, 128, 8
    $region53: #{tpu_custom_call.1} parent=1 // pred_fallthru
      _
    // Predicated region
    $region54: #{tpu_custom_call.1} parent=1 // pred_check
      _
    $region55: #{tpu_custom_call.1} parent=1 // pred_check_branch
      %1902 = sbr.rel (0) target = $region57
    $region56: #{tpu_custom_call.1} parent=1 // pred_region
      %1903 = dma.done [#allocation4], 1024
    $region57: #{tpu_custom_call.1} parent=1 // pred_fallthru
      _
    %1904 = vsyncpa [#allocation3], 1
    %1905 = vsyncpa [#allocation6], 1
    %1906 = vsyncpa [#allocation9], 1
    %1907 = vsyncpa [#allocation4], 1

</llo_original>
